<compile_context>
chip_gen: v5e
topology: v5e:2x2
jax: 0.10.0
libtpu: 0.0.40
codegen_flags: <defaults>
</compile_context>

<pallas_src>
import functools
import math

import jax
import jax.numpy as jnp
import numpy as np
from jax.experimental import pallas as pl
from jax.experimental.pallas import tpu as pltpu

# ----------------------------- configuration -------------------------------
ATT_N_BLOCKS = 2
D_MODEL = 32
FFN_HIDDEN = 64
ATT_N_HEAD = 4
BATCH = 2
SEQ = 8
LN_EPS = 1e-12  # custom LayerNorm eps used by the reference transformer impl


# ------------------------------ pallas kernel -------------------------------
def _layernorm(x, gamma, beta, eps=LN_EPS):
    mean = jnp.mean(x, axis=-1, keepdims=True)
    var = jnp.mean((x - mean) ** 2, axis=-1, keepdims=True)
    return (x - mean) * jax.lax.rsqrt(var + eps) * gamma + beta


def fused_attention_block_kernel(
    x_ref,        # (B, S, D)       full batch in one step
    wqkv_ref,     # (L, D, 3D)      head-major [q_h|k_h|v_h]; Q cols pre-scaled 1/sqrt(dh)
    wo_ref,       # (L, D, D)       output projection weights
    w1_ref,       # (L, D, F)       FFN first weights
    w2_ref,       # (L, F, D)       FFN second weights
    vec_ref,      # (L, 8, VMAX)    packed: bqkv|bo|ln1_g|ln1_b|b1|b2|ln2_g|ln2_b
    wfc_ref,      # (D, D//2)       final fc weight
    bfc_ref,      # (1, D//2)       final fc bias
    o_ref,        # (B, S*(D//2))   lane-dense output slab
    *, n_layers, n_head, d_ffn,
):
    batch, s_len, d_model = x_ref.shape
    d_head = d_model // n_head

    # Fold batch into the sublane (row) axis: (B, S, D) -> (B*S, D).
    x = jnp.concatenate([x_ref[b] for b in range(batch)], axis=0).astype(jnp.float32)

    for l in range(n_layers):                        # static unroll (n_layers == 2)
        wqkv = wqkv_ref[l]                           # (D, 3D)
        wo = wo_ref[l]                               # (D, D)
        w1 = w1_ref[l]                               # (D, F)
        w2 = w2_ref[l]                               # (F, D)
        vec = vec_ref[l]                             # (8, VMAX)
        bqkv = vec[0:1, : 3 * d_model]
        bo = vec[1:2, :d_model]
        ln1_g = vec[2:3, :d_model]
        ln1_b = vec[3:4, :d_model]
        b1 = vec[4:5, :d_ffn]
        b2 = vec[5:6, :d_model]
        ln2_g = vec[6:7, :d_model]
        ln2_b = vec[7:8, :d_model]

        # --- multi-head self attention: one fused QKV matmul for all B*S rows ----
        qkv = jnp.dot(x, wqkv, preferred_element_type=jnp.float32) + bqkv   # (B*S, 3D)

        # per-batch / per-head attention on (S,S) tiles; per-head ctx vectors are
        # lane-placed into one (B*S, D) buffer so Wo is applied with a single matmul.
        ctx_rows = []
        for b in range(batch):                       # static unroll (batch == 2)
            r0 = b * s_len
            head_parts = []
            for h in range(n_head):                  # static unroll (n_head == 4)
                c0 = 3 * d_head * h
                slab = qkv[r0:r0 + s_len, c0:c0 + 3 * d_head]   # (S, 3*dh) contiguous
                qh = slab[:, :d_head]                # already scaled by 1/sqrt(dh)
                kh = slab[:, d_head:2 * d_head]
                vh = slab[:, 2 * d_head:]
                s = jax.lax.dot_general(             # q_h @ k_h^T on the MXU
                    qh, kh, (((1,), (1,)), ((), ())),
                    preferred_element_type=jnp.float32)
                s = s - jnp.max(s, axis=-1, keepdims=True)
                p = jnp.exp(s)
                # keep the exact divide: approx EUP reciprocal is borderline vs 1e-4 tol
                p = p * pl.reciprocal(jnp.sum(p, axis=-1, keepdims=True), approx=False)
                head_parts.append(
                    jnp.dot(p, vh, preferred_element_type=jnp.float32))    # (S, dh)
            ctx_rows.append(jnp.concatenate(head_parts, axis=-1))          # (S, D)
        ctx = jnp.concatenate(ctx_rows, axis=0)                            # (B*S, D)

        # single output projection for all heads / all rows
        attn = jnp.dot(ctx, wo, preferred_element_type=jnp.float32) + bo

        # dropout(p=0) == identity; residual + LayerNorm 1
        h1 = _layernorm(attn + x, ln1_g, ln1_b)

        # --- position-wise feed forward -------------------------------------
        f = jnp.dot(h1, w1, preferred_element_type=jnp.float32) + b1
        f = jnp.maximum(f, 0.0)
        f = jnp.dot(f, w2, preferred_element_type=jnp.float32) + b2

        # dropout(p=0) == identity; residual + LayerNorm 2
        x = _layernorm(f + h1, ln2_g, ln2_b)

    # --- final fc(d_model -> d_model // 2) on all B*S rows at once ------------
    y = jnp.dot(x, wfc_ref[...], preferred_element_type=jnp.float32) + bfc_ref[...]

    # lane-dense (B, S*O) store: manual lane concat (relayout-safe "reshape") so the
    # final store is a full 128-lane vst instead of masked 16-lane partial stores.
    rows = []
    for b in range(batch):
        rows.append(jnp.concatenate(
            [y[b * s_len + s:b * s_len + s + 1, :] for s in range(s_len)], axis=-1))
    o_ref[...] = jnp.concatenate(rows, axis=0).astype(o_ref.dtype)


# ------------------------------ wrappers ------------------------------------
def _pack_params(params, n_head):
    """Stack per-layer weights by type, reorder QKV head-major, fold in the softmax
    scale, and pack all tiny vectors into one (L, 8, VMAX) slab."""
    layers = params["layers"]
    d_model = layers[0]["wq"].shape[0]
    d_ffn = layers[0]["w1"].shape[1]
    d_head = d_model // n_head
    scale = 1.0 / math.sqrt(d_head)
    vmax = max(3 * d_model, d_ffn)

    def pad(v):
        return jnp.pad(v, ((0, 0), (0, vmax - v.shape[1])))

    def head_major(q, k, v):
        cols = []
        for h in range(n_head):
            lo, hi = h * d_head, (h + 1) * d_head
            cols += [q[:, lo:hi], k[:, lo:hi], v[:, lo:hi]]
        return jnp.concatenate(cols, axis=1)

    wqkv = jnp.stack(
        [head_major(l["wq"] * scale, l["wk"], l["wv"]) for l in layers])
    wo = jnp.stack([l["wo"] for l in layers])
    w1 = jnp.stack([l["w1"] for l in layers])
    w2 = jnp.stack([l["w2"] for l in layers])
    vec = jnp.stack([
        jnp.concatenate([
            pad(head_major(l["bq"] * scale, l["bk"], l["bv"])),
            pad(l["bo"]), pad(l["ln1_g"]), pad(l["ln1_b"]),
            pad(l["b1"]), pad(l["b2"]), pad(l["ln2_g"]), pad(l["ln2_b"]),
        ], axis=0)
        for l in layers])
    return wqkv, wo, w1, w2, vec


def attention_block_forward(x, params, n_head):
    B, S, D = x.shape
    layers = params["layers"]
    L = len(layers)
    F = layers[0]["w1"].shape[1]
    O = params["fc_w"].shape[1]
    VMAX = max(3 * D, F)
    wqkv, wo, w1, w2, vec = _pack_params(params, n_head)
    kernel = functools.partial(
        fused_attention_block_kernel, n_layers=L, n_head=n_head, d_ffn=F)
    out = pl.pallas_call(
        kernel,
        out_shape=jax.ShapeDtypeStruct((B, S * O), x.dtype),
        grid_spec=pltpu.PrefetchScalarGridSpec(
            num_scalar_prefetch=0,
            grid=(1,),  # single step: whole (tiny) problem in one launch on one core
            in_specs=[
                pl.BlockSpec((B, S, D), lambda i: (0, 0, 0)),
                pl.BlockSpec((L, D, 3 * D), lambda i: (0, 0, 0)),
                pl.BlockSpec((L, D, D), lambda i: (0, 0, 0)),
                pl.BlockSpec((L, D, F), lambda i: (0, 0, 0)),
                pl.BlockSpec((L, F, D), lambda i: (0, 0, 0)),
                pl.BlockSpec((L, 8, VMAX), lambda i: (0, 0, 0)),
                pl.BlockSpec((D, O), lambda i: (0, 0)),
                pl.BlockSpec((1, O), lambda i: (0, 0)),
            ],
            out_specs=pl.BlockSpec((B, S * O), lambda i: (0, 0)),
        ),
        compiler_params=pltpu.CompilerParams(dimension_semantics=("arbitrary",)),
    )(x, wqkv, wo, w1, w2, vec, params["fc_w"], params["fc_b"])
    return out.reshape(B, S, O)


# ------------------------- deterministic parameters -------------------------
def init_params(key, n_blocks, d_model, ffn_hidden):
    def dense(k, fan_in, fan_out):
        return (0.02 * jax.random.normal(k, (fan_in, fan_out), jnp.float32),
                jnp.zeros((1, fan_out), jnp.float32))

    layers = []
    for _ in range(n_blocks):
        key, kq, kk, kv, ko, k1, k2 = jax.random.split(key, 7)
        wq, bq = dense(kq, d_model, d_model)
        wk, bk = dense(kk, d_model, d_model)
        wv, bv = dense(kv, d_model, d_model)
        wo, bo = dense(ko, d_model, d_model)
        w1, b1 = dense(k1, d_model, ffn_hidden)
        w2, b2 = dense(k2, ffn_hidden, d_model)
        layers.append(dict(
            wq=wq, bq=bq, wk=wk, bk=bk, wv=wv, bv=bv, wo=wo, bo=bo,
            ln1_g=jnp.ones((1, d_model), jnp.float32),
            ln1_b=jnp.zeros((1, d_model), jnp.float32),
            w1=w1, b1=b1, w2=w2, b2=b2,
            ln2_g=jnp.ones((1, d_model), jnp.float32),
            ln2_b=jnp.zeros((1, d_model), jnp.float32),
        ))
    key, kf = jax.random.split(key)
    fc_w, fc_b = dense(kf, d_model, d_model // 2)
    return dict(layers=layers, fc_w=fc_w, fc_b=fc_b)


# --------------------------- pure-JAX reference ------------------------------
def reference_forward(x, params, n_head):
    def ln(v, g, b):
        m = jnp.mean(v, -1, keepdims=True)
        var = jnp.mean((v - m) ** 2, -1, keepdims=True)
        return (v - m) / jnp.sqrt(var + LN_EPS) * g + b

    B, S, D = x.shape
    dh = D // n_head
    for p in params["layers"]:
        q = x @ p["wq"] + p["bq"]
        k = x @ p["wk"] + p["bk"]
        v = x @ p["wv"] + p["bv"]
        q = q.reshape(B, S, n_head, dh).transpose(0, 2, 1, 3)
        k = k.reshape(B, S, n_head, dh).transpose(0, 2, 1, 3)
        v = v.reshape(B, S, n_head, dh).transpose(0, 2, 1, 3)
        s = jnp.einsum("bhqd,bhkd->bhqk", q, k) / math.sqrt(dh)
        a = jax.nn.softmax(s, axis=-1)
        o = jnp.einsum("bhqk,bhkd->bhqd", a, v).transpose(0, 2, 1, 3).reshape(B, S, D)
        o = o @ p["wo"] + p["bo"]
        x = ln(o + x, p["ln1_g"], p["ln1_b"])
        f = jnp.maximum(x @ p["w1"] + p["b1"], 0.0) @ p["w2"] + p["b2"]
        x = ln(f + x, p["ln2_g"], p["ln2_b"])
    return x @ params["fc_w"] + params["fc_b"]


# ---------------------------------- main -------------------------------------
if __name__ == "__main__":
    key = jax.random.PRNGKey(0)
    key, kx, kp = jax.random.split(key, 3)
    x = jax.random.normal(kx, (BATCH, SEQ, D_MODEL), jnp.float32)
    params = init_params(kp, ATT_N_BLOCKS, D_MODEL, FFN_HIDDEN)

    out = attention_block_forward(x, params, ATT_N_HEAD)
    out = jax.block_until_ready(out)
    assert out.shape == (BATCH, SEQ, D_MODEL // 2), out.shape

    ref = reference_forward(x, params, ATT_N_HEAD)
    np.testing.assert_allclose(np.asarray(out), np.asarray(ref), rtol=1e-4, atol=1e-4)

    print("KERNEL_OK")
</pallas_src>

<mosaic_0001>
module attributes {stable_mosaic.version = 11 : i64} {
  func.func @fused_attention_block_kernel(%arg0: i32, %arg1: memref<2x8x32xf32, #tpu.memory_space<vmem>>, %arg2: memref<2x32x96xf32, #tpu.memory_space<vmem>>, %arg3: memref<2x32x32xf32, #tpu.memory_space<vmem>>, %arg4: memref<2x32x64xf32, #tpu.memory_space<vmem>>, %arg5: memref<2x64x32xf32, #tpu.memory_space<vmem>>, %arg6: memref<2x8x96xf32, #tpu.memory_space<vmem>>, %arg7: memref<32x16xf32, #tpu.memory_space<vmem>>, %arg8: memref<1x16xf32, #tpu.memory_space<vmem>>, %arg9: memref<2x128xf32, #tpu.memory_space<vmem>>) attributes {dimension_semantics = [#tpu.dimension_semantics<arbitrary>], iteration_bounds = array<i64: 1>, scalar_prefetch = 0 : i64, scratch_operands = 0 : i64, tpu.core_type = #tpu.core_type<tc>, window_params = [{pipeline_mode = #tpu.pipeline_mode<synchronous>, transform_indices = @transform_0, window_bounds = array<i64: 2, 8, 32>}, {pipeline_mode = #tpu.pipeline_mode<synchronous>, transform_indices = @transform_1, window_bounds = array<i64: 2, 32, 96>}, {pipeline_mode = #tpu.pipeline_mode<synchronous>, transform_indices = @transform_2, window_bounds = array<i64: 2, 32, 32>}, {pipeline_mode = #tpu.pipeline_mode<synchronous>, transform_indices = @transform_3, window_bounds = array<i64: 2, 32, 64>}, {pipeline_mode = #tpu.pipeline_mode<synchronous>, transform_indices = @transform_4, window_bounds = array<i64: 2, 64, 32>}, {pipeline_mode = #tpu.pipeline_mode<synchronous>, transform_indices = @transform_5, window_bounds = array<i64: 2, 8, 96>}, {pipeline_mode = #tpu.pipeline_mode<synchronous>, transform_indices = @transform_6, window_bounds = array<i64: 32, 16>}, {pipeline_mode = #tpu.pipeline_mode<synchronous>, transform_indices = @transform_7, window_bounds = array<i64: 1, 16>}, {pipeline_mode = #tpu.pipeline_mode<synchronous>, transform_indices = @transform_8, window_bounds = array<i64: 2, 128>}]} {
    %c0 = arith.constant 0 : index
    %c0_0 = arith.constant 0 : index
    %c0_1 = arith.constant 0 : index
    %0 = vector.load %arg1[%c0, %c0_0, %c0_1] : memref<2x8x32xf32, #tpu.memory_space<vmem>>, vector<1x8x32xf32>
    %1 = vector.shape_cast %0 : vector<1x8x32xf32> to vector<8x32xf32>
    %c1 = arith.constant 1 : index
    %c0_2 = arith.constant 0 : index
    %c0_3 = arith.constant 0 : index
    %2 = vector.load %arg1[%c1, %c0_2, %c0_3] : memref<2x8x32xf32, #tpu.memory_space<vmem>>, vector<1x8x32xf32>
    %3 = vector.shape_cast %2 : vector<1x8x32xf32> to vector<8x32xf32>
    %4 = tpu.concatenate %1, %3 in 0 : vector<8x32xf32>, vector<8x32xf32> -> vector<16x32xf32>
    %c0_4 = arith.constant 0 : index
    %c0_5 = arith.constant 0 : index
    %c0_6 = arith.constant 0 : index
    %5 = vector.load %arg2[%c0_4, %c0_5, %c0_6] : memref<2x32x96xf32, #tpu.memory_space<vmem>>, vector<1x32x96xf32>
    %6 = vector.shape_cast %5 : vector<1x32x96xf32> to vector<32x96xf32>
    %c0_7 = arith.constant 0 : index
    %c0_8 = arith.constant 0 : index
    %c0_9 = arith.constant 0 : index
    %7 = vector.load %arg3[%c0_7, %c0_8, %c0_9] : memref<2x32x32xf32, #tpu.memory_space<vmem>>, vector<1x32x32xf32>
    %8 = vector.shape_cast %7 : vector<1x32x32xf32> to vector<32x32xf32>
    %c0_10 = arith.constant 0 : index
    %c0_11 = arith.constant 0 : index
    %c0_12 = arith.constant 0 : index
    %9 = vector.load %arg4[%c0_10, %c0_11, %c0_12] : memref<2x32x64xf32, #tpu.memory_space<vmem>>, vector<1x32x64xf32>
    %10 = vector.shape_cast %9 : vector<1x32x64xf32> to vector<32x64xf32>
    %c0_13 = arith.constant 0 : index
    %c0_14 = arith.constant 0 : index
    %c0_15 = arith.constant 0 : index
    %11 = vector.load %arg5[%c0_13, %c0_14, %c0_15] : memref<2x64x32xf32, #tpu.memory_space<vmem>>, vector<1x64x32xf32>
    %12 = vector.shape_cast %11 : vector<1x64x32xf32> to vector<64x32xf32>
    %c0_16 = arith.constant 0 : index
    %c0_17 = arith.constant 0 : index
    %c0_18 = arith.constant 0 : index
    %13 = vector.load %arg6[%c0_16, %c0_17, %c0_18] : memref<2x8x96xf32, #tpu.memory_space<vmem>>, vector<1x8x96xf32>
    %14 = vector.shape_cast %13 : vector<1x8x96xf32> to vector<8x96xf32>
    %15 = vector.extract_strided_slice %14 {offsets = [0, 0], sizes = [1, 96], strides = [1, 1]} : vector<8x96xf32> to vector<1x96xf32>
    %16 = vector.extract_strided_slice %14 {offsets = [1, 0], sizes = [1, 32], strides = [1, 1]} : vector<8x96xf32> to vector<1x32xf32>
    %17 = vector.extract_strided_slice %14 {offsets = [2, 0], sizes = [1, 32], strides = [1, 1]} : vector<8x96xf32> to vector<1x32xf32>
    %18 = vector.extract_strided_slice %14 {offsets = [3, 0], sizes = [1, 32], strides = [1, 1]} : vector<8x96xf32> to vector<1x32xf32>
    %19 = vector.extract_strided_slice %14 {offsets = [4, 0], sizes = [1, 64], strides = [1, 1]} : vector<8x96xf32> to vector<1x64xf32>
    %20 = vector.extract_strided_slice %14 {offsets = [5, 0], sizes = [1, 32], strides = [1, 1]} : vector<8x96xf32> to vector<1x32xf32>
    %21 = vector.extract_strided_slice %14 {offsets = [6, 0], sizes = [1, 32], strides = [1, 1]} : vector<8x96xf32> to vector<1x32xf32>
    %22 = vector.extract_strided_slice %14 {offsets = [7, 0], sizes = [1, 32], strides = [1, 1]} : vector<8x96xf32> to vector<1x32xf32>
    %cst = arith.constant dense<0.000000e+00> : vector<16x96xf32>
    %23 = tpu.matmul %4, %6, %cst {dimension_numbers = #tpu.dot_dimension_numbers<[1], [0], [0], [1], [0, 0, 1, 1], [], []>} : vector<16x32xf32>, vector<32x96xf32>, vector<16x96xf32> -> vector<16x96xf32>
    %24 = vector.broadcast %15 : vector<1x96xf32> to vector<16x96xf32>
    %25 = arith.addf %23, %24 : vector<16x96xf32>
    %26 = vector.extract_strided_slice %25 {offsets = [0, 0], sizes = [8, 24], strides = [1, 1]} : vector<16x96xf32> to vector<8x24xf32>
    %27 = vector.extract_strided_slice %26 {offsets = [0, 0], sizes = [8, 8], strides = [1, 1]} : vector<8x24xf32> to vector<8x8xf32>
    %28 = vector.extract_strided_slice %26 {offsets = [0, 8], sizes = [8, 8], strides = [1, 1]} : vector<8x24xf32> to vector<8x8xf32>
    %29 = vector.extract_strided_slice %26 {offsets = [0, 16], sizes = [8, 8], strides = [1, 1]} : vector<8x24xf32> to vector<8x8xf32>
    %cst_19 = arith.constant dense<0.000000e+00> : vector<8x8xf32>
    %30 = tpu.matmul %27, %28, %cst_19 {dimension_numbers = #tpu.dot_dimension_numbers<[1], [1], [0], [0], [0, 0, 1, 0], [], []>} : vector<8x8xf32>, vector<8x8xf32>, vector<8x8xf32> -> vector<8x8xf32>
    %cst_20 = arith.constant dense<0xFF800000> : vector<8xf32>
    %31 = vector.multi_reduction <maximumf>, %30, %cst_20 [1] : vector<8x8xf32> to vector<8xf32>
    %32 = vector.shape_cast %31 : vector<8xf32> to vector<8x1xf32>
    %33 = vector.broadcast %32 : vector<8x1xf32> to vector<8x8xf32>
    %34 = arith.subf %30, %33 : vector<8x8xf32>
    %35 = math.exp %34 : vector<8x8xf32>
    %cst_21 = arith.constant dense<0.000000e+00> : vector<8xf32>
    %36 = vector.multi_reduction <add>, %35, %cst_21 [1] : vector<8x8xf32> to vector<8xf32>
    %37 = vector.shape_cast %36 : vector<8xf32> to vector<8x1xf32>
    %38 = tpu.reciprocal %37 : vector<8x1xf32> -> vector<8x1xf32>
    %39 = vector.broadcast %38 : vector<8x1xf32> to vector<8x8xf32>
    %40 = arith.mulf %35, %39 : vector<8x8xf32>
    %cst_22 = arith.constant dense<0.000000e+00> : vector<8x8xf32>
    %41 = tpu.matmul %40, %29, %cst_22 {dimension_numbers = #tpu.dot_dimension_numbers<[1], [0], [0], [1], [0, 0, 1, 1], [], []>} : vector<8x8xf32>, vector<8x8xf32>, vector<8x8xf32> -> vector<8x8xf32>
    %42 = vector.extract_strided_slice %25 {offsets = [0, 24], sizes = [8, 24], strides = [1, 1]} : vector<16x96xf32> to vector<8x24xf32>
    %43 = vector.extract_strided_slice %42 {offsets = [0, 0], sizes = [8, 8], strides = [1, 1]} : vector<8x24xf32> to vector<8x8xf32>
    %44 = vector.extract_strided_slice %42 {offsets = [0, 8], sizes = [8, 8], strides = [1, 1]} : vector<8x24xf32> to vector<8x8xf32>
    %45 = vector.extract_strided_slice %42 {offsets = [0, 16], sizes = [8, 8], strides = [1, 1]} : vector<8x24xf32> to vector<8x8xf32>
    %cst_23 = arith.constant dense<0.000000e+00> : vector<8x8xf32>
    %46 = tpu.matmul %43, %44, %cst_23 {dimension_numbers = #tpu.dot_dimension_numbers<[1], [1], [0], [0], [0, 0, 1, 0], [], []>} : vector<8x8xf32>, vector<8x8xf32>, vector<8x8xf32> -> vector<8x8xf32>
    %cst_24 = arith.constant dense<0xFF800000> : vector<8xf32>
    %47 = vector.multi_reduction <maximumf>, %46, %cst_24 [1] : vector<8x8xf32> to vector<8xf32>
    %48 = vector.shape_cast %47 : vector<8xf32> to vector<8x1xf32>
    %49 = vector.broadcast %48 : vector<8x1xf32> to vector<8x8xf32>
    %50 = arith.subf %46, %49 : vector<8x8xf32>
    %51 = math.exp %50 : vector<8x8xf32>
    %cst_25 = arith.constant dense<0.000000e+00> : vector<8xf32>
    %52 = vector.multi_reduction <add>, %51, %cst_25 [1] : vector<8x8xf32> to vector<8xf32>
    %53 = vector.shape_cast %52 : vector<8xf32> to vector<8x1xf32>
    %54 = tpu.reciprocal %53 : vector<8x1xf32> -> vector<8x1xf32>
    %55 = vector.broadcast %54 : vector<8x1xf32> to vector<8x8xf32>
    %56 = arith.mulf %51, %55 : vector<8x8xf32>
    %cst_26 = arith.constant dense<0.000000e+00> : vector<8x8xf32>
    %57 = tpu.matmul %56, %45, %cst_26 {dimension_numbers = #tpu.dot_dimension_numbers<[1], [0], [0], [1], [0, 0, 1, 1], [], []>} : vector<8x8xf32>, vector<8x8xf32>, vector<8x8xf32> -> vector<8x8xf32>
    %58 = vector.extract_strided_slice %25 {offsets = [0, 48], sizes = [8, 24], strides = [1, 1]} : vector<16x96xf32> to vector<8x24xf32>
    %59 = vector.extract_strided_slice %58 {offsets = [0, 0], sizes = [8, 8], strides = [1, 1]} : vector<8x24xf32> to vector<8x8xf32>
    %60 = vector.extract_strided_slice %58 {offsets = [0, 8], sizes = [8, 8], strides = [1, 1]} : vector<8x24xf32> to vector<8x8xf32>
    %61 = vector.extract_strided_slice %58 {offsets = [0, 16], sizes = [8, 8], strides = [1, 1]} : vector<8x24xf32> to vector<8x8xf32>
    %cst_27 = arith.constant dense<0.000000e+00> : vector<8x8xf32>
    %62 = tpu.matmul %59, %60, %cst_27 {dimension_numbers = #tpu.dot_dimension_numbers<[1], [1], [0], [0], [0, 0, 1, 0], [], []>} : vector<8x8xf32>, vector<8x8xf32>, vector<8x8xf32> -> vector<8x8xf32>
    %cst_28 = arith.constant dense<0xFF800000> : vector<8xf32>
    %63 = vector.multi_reduction <maximumf>, %62, %cst_28 [1] : vector<8x8xf32> to vector<8xf32>
    %64 = vector.shape_cast %63 : vector<8xf32> to vector<8x1xf32>
    %65 = vector.broadcast %64 : vector<8x1xf32> to vector<8x8xf32>
    %66 = arith.subf %62, %65 : vector<8x8xf32>
    %67 = math.exp %66 : vector<8x8xf32>
    %cst_29 = arith.constant dense<0.000000e+00> : vector<8xf32>
    %68 = vector.multi_reduction <add>, %67, %cst_29 [1] : vector<8x8xf32> to vector<8xf32>
    %69 = vector.shape_cast %68 : vector<8xf32> to vector<8x1xf32>
    %70 = tpu.reciprocal %69 : vector<8x1xf32> -> vector<8x1xf32>
    %71 = vector.broadcast %70 : vector<8x1xf32> to vector<8x8xf32>
    %72 = arith.mulf %67, %71 : vector<8x8xf32>
    %cst_30 = arith.constant dense<0.000000e+00> : vector<8x8xf32>
    %73 = tpu.matmul %72, %61, %cst_30 {dimension_numbers = #tpu.dot_dimension_numbers<[1], [0], [0], [1], [0, 0, 1, 1], [], []>} : vector<8x8xf32>, vector<8x8xf32>, vector<8x8xf32> -> vector<8x8xf32>
    %74 = vector.extract_strided_slice %25 {offsets = [0, 72], sizes = [8, 24], strides = [1, 1]} : vector<16x96xf32> to vector<8x24xf32>
    %75 = vector.extract_strided_slice %74 {offsets = [0, 0], sizes = [8, 8], strides = [1, 1]} : vector<8x24xf32> to vector<8x8xf32>
    %76 = vector.extract_strided_slice %74 {offsets = [0, 8], sizes = [8, 8], strides = [1, 1]} : vector<8x24xf32> to vector<8x8xf32>
    %77 = vector.extract_strided_slice %74 {offsets = [0, 16], sizes = [8, 8], strides = [1, 1]} : vector<8x24xf32> to vector<8x8xf32>
    %cst_31 = arith.constant dense<0.000000e+00> : vector<8x8xf32>
    %78 = tpu.matmul %75, %76, %cst_31 {dimension_numbers = #tpu.dot_dimension_numbers<[1], [1], [0], [0], [0, 0, 1, 0], [], []>} : vector<8x8xf32>, vector<8x8xf32>, vector<8x8xf32> -> vector<8x8xf32>
    %cst_32 = arith.constant dense<0xFF800000> : vector<8xf32>
    %79 = vector.multi_reduction <maximumf>, %78, %cst_32 [1] : vector<8x8xf32> to vector<8xf32>
    %80 = vector.shape_cast %79 : vector<8xf32> to vector<8x1xf32>
    %81 = vector.broadcast %80 : vector<8x1xf32> to vector<8x8xf32>
    %82 = arith.subf %78, %81 : vector<8x8xf32>
    %83 = math.exp %82 : vector<8x8xf32>
    %cst_33 = arith.constant dense<0.000000e+00> : vector<8xf32>
    %84 = vector.multi_reduction <add>, %83, %cst_33 [1] : vector<8x8xf32> to vector<8xf32>
    %85 = vector.shape_cast %84 : vector<8xf32> to vector<8x1xf32>
    %86 = tpu.reciprocal %85 : vector<8x1xf32> -> vector<8x1xf32>
    %87 = vector.broadcast %86 : vector<8x1xf32> to vector<8x8xf32>
    %88 = arith.mulf %83, %87 : vector<8x8xf32>
    %cst_34 = arith.constant dense<0.000000e+00> : vector<8x8xf32>
    %89 = tpu.matmul %88, %77, %cst_34 {dimension_numbers = #tpu.dot_dimension_numbers<[1], [0], [0], [1], [0, 0, 1, 1], [], []>} : vector<8x8xf32>, vector<8x8xf32>, vector<8x8xf32> -> vector<8x8xf32>
    %90 = tpu.concatenate %41, %57, %73, %89 in 1 : vector<8x8xf32>, vector<8x8xf32>, vector<8x8xf32>, vector<8x8xf32> -> vector<8x32xf32>
    %91 = vector.extract_strided_slice %25 {offsets = [8, 0], sizes = [8, 24], strides = [1, 1]} : vector<16x96xf32> to vector<8x24xf32>
    %92 = vector.extract_strided_slice %91 {offsets = [0, 0], sizes = [8, 8], strides = [1, 1]} : vector<8x24xf32> to vector<8x8xf32>
    %93 = vector.extract_strided_slice %91 {offsets = [0, 8], sizes = [8, 8], strides = [1, 1]} : vector<8x24xf32> to vector<8x8xf32>
    %94 = vector.extract_strided_slice %91 {offsets = [0, 16], sizes = [8, 8], strides = [1, 1]} : vector<8x24xf32> to vector<8x8xf32>
    %cst_35 = arith.constant dense<0.000000e+00> : vector<8x8xf32>
    %95 = tpu.matmul %92, %93, %cst_35 {dimension_numbers = #tpu.dot_dimension_numbers<[1], [1], [0], [0], [0, 0, 1, 0], [], []>} : vector<8x8xf32>, vector<8x8xf32>, vector<8x8xf32> -> vector<8x8xf32>
    %cst_36 = arith.constant dense<0xFF800000> : vector<8xf32>
    %96 = vector.multi_reduction <maximumf>, %95, %cst_36 [1] : vector<8x8xf32> to vector<8xf32>
    %97 = vector.shape_cast %96 : vector<8xf32> to vector<8x1xf32>
    %98 = vector.broadcast %97 : vector<8x1xf32> to vector<8x8xf32>
    %99 = arith.subf %95, %98 : vector<8x8xf32>
    %100 = math.exp %99 : vector<8x8xf32>
    %cst_37 = arith.constant dense<0.000000e+00> : vector<8xf32>
    %101 = vector.multi_reduction <add>, %100, %cst_37 [1] : vector<8x8xf32> to vector<8xf32>
    %102 = vector.shape_cast %101 : vector<8xf32> to vector<8x1xf32>
    %103 = tpu.reciprocal %102 : vector<8x1xf32> -> vector<8x1xf32>
    %104 = vector.broadcast %103 : vector<8x1xf32> to vector<8x8xf32>
    %105 = arith.mulf %100, %104 : vector<8x8xf32>
    %cst_38 = arith.constant dense<0.000000e+00> : vector<8x8xf32>
    %106 = tpu.matmul %105, %94, %cst_38 {dimension_numbers = #tpu.dot_dimension_numbers<[1], [0], [0], [1], [0, 0, 1, 1], [], []>} : vector<8x8xf32>, vector<8x8xf32>, vector<8x8xf32> -> vector<8x8xf32>
    %107 = vector.extract_strided_slice %25 {offsets = [8, 24], sizes = [8, 24], strides = [1, 1]} : vector<16x96xf32> to vector<8x24xf32>
    %108 = vector.extract_strided_slice %107 {offsets = [0, 0], sizes = [8, 8], strides = [1, 1]} : vector<8x24xf32> to vector<8x8xf32>
    %109 = vector.extract_strided_slice %107 {offsets = [0, 8], sizes = [8, 8], strides = [1, 1]} : vector<8x24xf32> to vector<8x8xf32>
    %110 = vector.extract_strided_slice %107 {offsets = [0, 16], sizes = [8, 8], strides = [1, 1]} : vector<8x24xf32> to vector<8x8xf32>
    %cst_39 = arith.constant dense<0.000000e+00> : vector<8x8xf32>
    %111 = tpu.matmul %108, %109, %cst_39 {dimension_numbers = #tpu.dot_dimension_numbers<[1], [1], [0], [0], [0, 0, 1, 0], [], []>} : vector<8x8xf32>, vector<8x8xf32>, vector<8x8xf32> -> vector<8x8xf32>
    %cst_40 = arith.constant dense<0xFF800000> : vector<8xf32>
    %112 = vector.multi_reduction <maximumf>, %111, %cst_40 [1] : vector<8x8xf32> to vector<8xf32>
    %113 = vector.shape_cast %112 : vector<8xf32> to vector<8x1xf32>
    %114 = vector.broadcast %113 : vector<8x1xf32> to vector<8x8xf32>
    %115 = arith.subf %111, %114 : vector<8x8xf32>
    %116 = math.exp %115 : vector<8x8xf32>
    %cst_41 = arith.constant dense<0.000000e+00> : vector<8xf32>
    %117 = vector.multi_reduction <add>, %116, %cst_41 [1] : vector<8x8xf32> to vector<8xf32>
    %118 = vector.shape_cast %117 : vector<8xf32> to vector<8x1xf32>
    %119 = tpu.reciprocal %118 : vector<8x1xf32> -> vector<8x1xf32>
    %120 = vector.broadcast %119 : vector<8x1xf32> to vector<8x8xf32>
    %121 = arith.mulf %116, %120 : vector<8x8xf32>
    %cst_42 = arith.constant dense<0.000000e+00> : vector<8x8xf32>
    %122 = tpu.matmul %121, %110, %cst_42 {dimension_numbers = #tpu.dot_dimension_numbers<[1], [0], [0], [1], [0, 0, 1, 1], [], []>} : vector<8x8xf32>, vector<8x8xf32>, vector<8x8xf32> -> vector<8x8xf32>
    %123 = vector.extract_strided_slice %25 {offsets = [8, 48], sizes = [8, 24], strides = [1, 1]} : vector<16x96xf32> to vector<8x24xf32>
    %124 = vector.extract_strided_slice %123 {offsets = [0, 0], sizes = [8, 8], strides = [1, 1]} : vector<8x24xf32> to vector<8x8xf32>
    %125 = vector.extract_strided_slice %123 {offsets = [0, 8], sizes = [8, 8], strides = [1, 1]} : vector<8x24xf32> to vector<8x8xf32>
    %126 = vector.extract_strided_slice %123 {offsets = [0, 16], sizes = [8, 8], strides = [1, 1]} : vector<8x24xf32> to vector<8x8xf32>
    %cst_43 = arith.constant dense<0.000000e+00> : vector<8x8xf32>
    %127 = tpu.matmul %124, %125, %cst_43 {dimension_numbers = #tpu.dot_dimension_numbers<[1], [1], [0], [0], [0, 0, 1, 0], [], []>} : vector<8x8xf32>, vector<8x8xf32>, vector<8x8xf32> -> vector<8x8xf32>
    %cst_44 = arith.constant dense<0xFF800000> : vector<8xf32>
    %128 = vector.multi_reduction <maximumf>, %127, %cst_44 [1] : vector<8x8xf32> to vector<8xf32>
    %129 = vector.shape_cast %128 : vector<8xf32> to vector<8x1xf32>
    %130 = vector.broadcast %129 : vector<8x1xf32> to vector<8x8xf32>
    %131 = arith.subf %127, %130 : vector<8x8xf32>
    %132 = math.exp %131 : vector<8x8xf32>
    %cst_45 = arith.constant dense<0.000000e+00> : vector<8xf32>
    %133 = vector.multi_reduction <add>, %132, %cst_45 [1] : vector<8x8xf32> to vector<8xf32>
    %134 = vector.shape_cast %133 : vector<8xf32> to vector<8x1xf32>
    %135 = tpu.reciprocal %134 : vector<8x1xf32> -> vector<8x1xf32>
    %136 = vector.broadcast %135 : vector<8x1xf32> to vector<8x8xf32>
    %137 = arith.mulf %132, %136 : vector<8x8xf32>
    %cst_46 = arith.constant dense<0.000000e+00> : vector<8x8xf32>
    %138 = tpu.matmul %137, %126, %cst_46 {dimension_numbers = #tpu.dot_dimension_numbers<[1], [0], [0], [1], [0, 0, 1, 1], [], []>} : vector<8x8xf32>, vector<8x8xf32>, vector<8x8xf32> -> vector<8x8xf32>
    %139 = vector.extract_strided_slice %25 {offsets = [8, 72], sizes = [8, 24], strides = [1, 1]} : vector<16x96xf32> to vector<8x24xf32>
    %140 = vector.extract_strided_slice %139 {offsets = [0, 0], sizes = [8, 8], strides = [1, 1]} : vector<8x24xf32> to vector<8x8xf32>
    %141 = vector.extract_strided_slice %139 {offsets = [0, 8], sizes = [8, 8], strides = [1, 1]} : vector<8x24xf32> to vector<8x8xf32>
    %142 = vector.extract_strided_slice %139 {offsets = [0, 16], sizes = [8, 8], strides = [1, 1]} : vector<8x24xf32> to vector<8x8xf32>
    %cst_47 = arith.constant dense<0.000000e+00> : vector<8x8xf32>
    %143 = tpu.matmul %140, %141, %cst_47 {dimension_numbers = #tpu.dot_dimension_numbers<[1], [1], [0], [0], [0, 0, 1, 0], [], []>} : vector<8x8xf32>, vector<8x8xf32>, vector<8x8xf32> -> vector<8x8xf32>
    %cst_48 = arith.constant dense<0xFF800000> : vector<8xf32>
    %144 = vector.multi_reduction <maximumf>, %143, %cst_48 [1] : vector<8x8xf32> to vector<8xf32>
    %145 = vector.shape_cast %144 : vector<8xf32> to vector<8x1xf32>
    %146 = vector.broadcast %145 : vector<8x1xf32> to vector<8x8xf32>
    %147 = arith.subf %143, %146 : vector<8x8xf32>
    %148 = math.exp %147 : vector<8x8xf32>
    %cst_49 = arith.constant dense<0.000000e+00> : vector<8xf32>
    %149 = vector.multi_reduction <add>, %148, %cst_49 [1] : vector<8x8xf32> to vector<8xf32>
    %150 = vector.shape_cast %149 : vector<8xf32> to vector<8x1xf32>
    %151 = tpu.reciprocal %150 : vector<8x1xf32> -> vector<8x1xf32>
    %152 = vector.broadcast %151 : vector<8x1xf32> to vector<8x8xf32>
    %153 = arith.mulf %148, %152 : vector<8x8xf32>
    %cst_50 = arith.constant dense<0.000000e+00> : vector<8x8xf32>
    %154 = tpu.matmul %153, %142, %cst_50 {dimension_numbers = #tpu.dot_dimension_numbers<[1], [0], [0], [1], [0, 0, 1, 1], [], []>} : vector<8x8xf32>, vector<8x8xf32>, vector<8x8xf32> -> vector<8x8xf32>
    %155 = tpu.concatenate %106, %122, %138, %154 in 1 : vector<8x8xf32>, vector<8x8xf32>, vector<8x8xf32>, vector<8x8xf32> -> vector<8x32xf32>
    %156 = tpu.concatenate %90, %155 in 0 : vector<8x32xf32>, vector<8x32xf32> -> vector<16x32xf32>
    %cst_51 = arith.constant dense<0.000000e+00> : vector<16x32xf32>
    %157 = tpu.matmul %156, %8, %cst_51 {dimension_numbers = #tpu.dot_dimension_numbers<[1], [0], [0], [1], [0, 0, 1, 1], [], []>} : vector<16x32xf32>, vector<32x32xf32>, vector<16x32xf32> -> vector<16x32xf32>
    %158 = vector.broadcast %16 : vector<1x32xf32> to vector<16x32xf32>
    %159 = arith.addf %157, %158 : vector<16x32xf32>
    %160 = arith.addf %159, %4 : vector<16x32xf32>
    %cst_52 = arith.constant dense<0.000000e+00> : vector<16xf32>
    %161 = vector.multi_reduction <add>, %160, %cst_52 [1] : vector<16x32xf32> to vector<16xf32>
    %162 = vector.shape_cast %161 : vector<16xf32> to vector<16x1xf32>
    %cst_53 = arith.constant 3.200000e+01 : f32
    %163 = vector.broadcast %cst_53 : f32 to vector<16x1xf32>
    %164 = arith.divf %162, %163 : vector<16x1xf32>
    %165 = vector.broadcast %164 : vector<16x1xf32> to vector<16x32xf32>
    %166 = arith.subf %160, %165 : vector<16x32xf32>
    %167 = arith.mulf %166, %166 : vector<16x32xf32>
    %cst_54 = arith.constant dense<0.000000e+00> : vector<16xf32>
    %168 = vector.multi_reduction <add>, %167, %cst_54 [1] : vector<16x32xf32> to vector<16xf32>
    %169 = vector.shape_cast %168 : vector<16xf32> to vector<16x1xf32>
    %cst_55 = arith.constant 3.200000e+01 : f32
    %170 = vector.broadcast %cst_55 : f32 to vector<16x1xf32>
    %171 = arith.divf %169, %170 : vector<16x1xf32>
    %172 = vector.broadcast %164 : vector<16x1xf32> to vector<16x32xf32>
    %173 = arith.subf %160, %172 : vector<16x32xf32>
    %cst_56 = arith.constant 9.99999996E-13 : f32
    %174 = vector.broadcast %cst_56 : f32 to vector<16x1xf32>
    %175 = arith.addf %171, %174 : vector<16x1xf32>
    %176 = math.rsqrt %175 : vector<16x1xf32>
    %177 = vector.broadcast %176 : vector<16x1xf32> to vector<16x32xf32>
    %178 = arith.mulf %173, %177 : vector<16x32xf32>
    %179 = vector.broadcast %17 : vector<1x32xf32> to vector<16x32xf32>
    %180 = arith.mulf %178, %179 : vector<16x32xf32>
    %181 = vector.broadcast %18 : vector<1x32xf32> to vector<16x32xf32>
    %182 = arith.addf %180, %181 : vector<16x32xf32>
    %cst_57 = arith.constant dense<0.000000e+00> : vector<16x64xf32>
    %183 = tpu.matmul %182, %10, %cst_57 {dimension_numbers = #tpu.dot_dimension_numbers<[1], [0], [0], [1], [0, 0, 1, 1], [], []>} : vector<16x32xf32>, vector<32x64xf32>, vector<16x64xf32> -> vector<16x64xf32>
    %184 = vector.broadcast %19 : vector<1x64xf32> to vector<16x64xf32>
    %185 = arith.addf %183, %184 : vector<16x64xf32>
    %cst_58 = arith.constant 0.000000e+00 : f32
    %186 = vector.broadcast %cst_58 : f32 to vector<16x64xf32>
    %187 = arith.maximumf %185, %186 : vector<16x64xf32>
    %cst_59 = arith.constant dense<0.000000e+00> : vector<16x32xf32>
    %188 = tpu.matmul %187, %12, %cst_59 {dimension_numbers = #tpu.dot_dimension_numbers<[1], [0], [0], [1], [0, 0, 1, 1], [], []>} : vector<16x64xf32>, vector<64x32xf32>, vector<16x32xf32> -> vector<16x32xf32>
    %189 = vector.broadcast %20 : vector<1x32xf32> to vector<16x32xf32>
    %190 = arith.addf %188, %189 : vector<16x32xf32>
    %191 = arith.addf %190, %182 : vector<16x32xf32>
    %cst_60 = arith.constant dense<0.000000e+00> : vector<16xf32>
    %192 = vector.multi_reduction <add>, %191, %cst_60 [1] : vector<16x32xf32> to vector<16xf32>
    %193 = vector.shape_cast %192 : vector<16xf32> to vector<16x1xf32>
    %cst_61 = arith.constant 3.200000e+01 : f32
    %194 = vector.broadcast %cst_61 : f32 to vector<16x1xf32>
    %195 = arith.divf %193, %194 : vector<16x1xf32>
    %196 = vector.broadcast %195 : vector<16x1xf32> to vector<16x32xf32>
    %197 = arith.subf %191, %196 : vector<16x32xf32>
    %198 = arith.mulf %197, %197 : vector<16x32xf32>
    %cst_62 = arith.constant dense<0.000000e+00> : vector<16xf32>
    %199 = vector.multi_reduction <add>, %198, %cst_62 [1] : vector<16x32xf32> to vector<16xf32>
    %200 = vector.shape_cast %199 : vector<16xf32> to vector<16x1xf32>
    %cst_63 = arith.constant 3.200000e+01 : f32
    %201 = vector.broadcast %cst_63 : f32 to vector<16x1xf32>
    %202 = arith.divf %200, %201 : vector<16x1xf32>
    %203 = vector.broadcast %195 : vector<16x1xf32> to vector<16x32xf32>
    %204 = arith.subf %191, %203 : vector<16x32xf32>
    %cst_64 = arith.constant 9.99999996E-13 : f32
    %205 = vector.broadcast %cst_64 : f32 to vector<16x1xf32>
    %206 = arith.addf %202, %205 : vector<16x1xf32>
    %207 = math.rsqrt %206 : vector<16x1xf32>
    %208 = vector.broadcast %207 : vector<16x1xf32> to vector<16x32xf32>
    %209 = arith.mulf %204, %208 : vector<16x32xf32>
    %210 = vector.broadcast %21 : vector<1x32xf32> to vector<16x32xf32>
    %211 = arith.mulf %209, %210 : vector<16x32xf32>
    %212 = vector.broadcast %22 : vector<1x32xf32> to vector<16x32xf32>
    %213 = arith.addf %211, %212 : vector<16x32xf32>
    %c1_65 = arith.constant 1 : index
    %c0_66 = arith.constant 0 : index
    %c0_67 = arith.constant 0 : index
    %214 = vector.load %arg2[%c1_65, %c0_66, %c0_67] : memref<2x32x96xf32, #tpu.memory_space<vmem>>, vector<1x32x96xf32>
    %215 = vector.shape_cast %214 : vector<1x32x96xf32> to vector<32x96xf32>
    %c1_68 = arith.constant 1 : index
    %c0_69 = arith.constant 0 : index
    %c0_70 = arith.constant 0 : index
    %216 = vector.load %arg3[%c1_68, %c0_69, %c0_70] : memref<2x32x32xf32, #tpu.memory_space<vmem>>, vector<1x32x32xf32>
    %217 = vector.shape_cast %216 : vector<1x32x32xf32> to vector<32x32xf32>
    %c1_71 = arith.constant 1 : index
    %c0_72 = arith.constant 0 : index
    %c0_73 = arith.constant 0 : index
    %218 = vector.load %arg4[%c1_71, %c0_72, %c0_73] : memref<2x32x64xf32, #tpu.memory_space<vmem>>, vector<1x32x64xf32>
    %219 = vector.shape_cast %218 : vector<1x32x64xf32> to vector<32x64xf32>
    %c1_74 = arith.constant 1 : index
    %c0_75 = arith.constant 0 : index
    %c0_76 = arith.constant 0 : index
    %220 = vector.load %arg5[%c1_74, %c0_75, %c0_76] : memref<2x64x32xf32, #tpu.memory_space<vmem>>, vector<1x64x32xf32>
    %221 = vector.shape_cast %220 : vector<1x64x32xf32> to vector<64x32xf32>
    %c1_77 = arith.constant 1 : index
    %c0_78 = arith.constant 0 : index
    %c0_79 = arith.constant 0 : index
    %222 = vector.load %arg6[%c1_77, %c0_78, %c0_79] : memref<2x8x96xf32, #tpu.memory_space<vmem>>, vector<1x8x96xf32>
    %223 = vector.shape_cast %222 : vector<1x8x96xf32> to vector<8x96xf32>
    %224 = vector.extract_strided_slice %223 {offsets = [0, 0], sizes = [1, 96], strides = [1, 1]} : vector<8x96xf32> to vector<1x96xf32>
    %225 = vector.extract_strided_slice %223 {offsets = [1, 0], sizes = [1, 32], strides = [1, 1]} : vector<8x96xf32> to vector<1x32xf32>
    %226 = vector.extract_strided_slice %223 {offsets = [2, 0], sizes = [1, 32], strides = [1, 1]} : vector<8x96xf32> to vector<1x32xf32>
    %227 = vector.extract_strided_slice %223 {offsets = [3, 0], sizes = [1, 32], strides = [1, 1]} : vector<8x96xf32> to vector<1x32xf32>
    %228 = vector.extract_strided_slice %223 {offsets = [4, 0], sizes = [1, 64], strides = [1, 1]} : vector<8x96xf32> to vector<1x64xf32>
    %229 = vector.extract_strided_slice %223 {offsets = [5, 0], sizes = [1, 32], strides = [1, 1]} : vector<8x96xf32> to vector<1x32xf32>
    %230 = vector.extract_strided_slice %223 {offsets = [6, 0], sizes = [1, 32], strides = [1, 1]} : vector<8x96xf32> to vector<1x32xf32>
    %231 = vector.extract_strided_slice %223 {offsets = [7, 0], sizes = [1, 32], strides = [1, 1]} : vector<8x96xf32> to vector<1x32xf32>
    %cst_80 = arith.constant dense<0.000000e+00> : vector<16x96xf32>
    %232 = tpu.matmul %213, %215, %cst_80 {dimension_numbers = #tpu.dot_dimension_numbers<[1], [0], [0], [1], [0, 0, 1, 1], [], []>} : vector<16x32xf32>, vector<32x96xf32>, vector<16x96xf32> -> vector<16x96xf32>
    %233 = vector.broadcast %224 : vector<1x96xf32> to vector<16x96xf32>
    %234 = arith.addf %232, %233 : vector<16x96xf32>
    %235 = vector.extract_strided_slice %234 {offsets = [0, 0], sizes = [8, 24], strides = [1, 1]} : vector<16x96xf32> to vector<8x24xf32>
    %236 = vector.extract_strided_slice %235 {offsets = [0, 0], sizes = [8, 8], strides = [1, 1]} : vector<8x24xf32> to vector<8x8xf32>
    %237 = vector.extract_strided_slice %235 {offsets = [0, 8], sizes = [8, 8], strides = [1, 1]} : vector<8x24xf32> to vector<8x8xf32>
    %238 = vector.extract_strided_slice %235 {offsets = [0, 16], sizes = [8, 8], strides = [1, 1]} : vector<8x24xf32> to vector<8x8xf32>
    %cst_81 = arith.constant dense<0.000000e+00> : vector<8x8xf32>
    %239 = tpu.matmul %236, %237, %cst_81 {dimension_numbers = #tpu.dot_dimension_numbers<[1], [1], [0], [0], [0, 0, 1, 0], [], []>} : vector<8x8xf32>, vector<8x8xf32>, vector<8x8xf32> -> vector<8x8xf32>
    %cst_82 = arith.constant dense<0xFF800000> : vector<8xf32>
    %240 = vector.multi_reduction <maximumf>, %239, %cst_82 [1] : vector<8x8xf32> to vector<8xf32>
    %241 = vector.shape_cast %240 : vector<8xf32> to vector<8x1xf32>
    %242 = vector.broadcast %241 : vector<8x1xf32> to vector<8x8xf32>
    %243 = arith.subf %239, %242 : vector<8x8xf32>
    %244 = math.exp %243 : vector<8x8xf32>
    %cst_83 = arith.constant dense<0.000000e+00> : vector<8xf32>
    %245 = vector.multi_reduction <add>, %244, %cst_83 [1] : vector<8x8xf32> to vector<8xf32>
    %246 = vector.shape_cast %245 : vector<8xf32> to vector<8x1xf32>
    %247 = tpu.reciprocal %246 : vector<8x1xf32> -> vector<8x1xf32>
    %248 = vector.broadcast %247 : vector<8x1xf32> to vector<8x8xf32>
    %249 = arith.mulf %244, %248 : vector<8x8xf32>
    %cst_84 = arith.constant dense<0.000000e+00> : vector<8x8xf32>
    %250 = tpu.matmul %249, %238, %cst_84 {dimension_numbers = #tpu.dot_dimension_numbers<[1], [0], [0], [1], [0, 0, 1, 1], [], []>} : vector<8x8xf32>, vector<8x8xf32>, vector<8x8xf32> -> vector<8x8xf32>
    %251 = vector.extract_strided_slice %234 {offsets = [0, 24], sizes = [8, 24], strides = [1, 1]} : vector<16x96xf32> to vector<8x24xf32>
    %252 = vector.extract_strided_slice %251 {offsets = [0, 0], sizes = [8, 8], strides = [1, 1]} : vector<8x24xf32> to vector<8x8xf32>
    %253 = vector.extract_strided_slice %251 {offsets = [0, 8], sizes = [8, 8], strides = [1, 1]} : vector<8x24xf32> to vector<8x8xf32>
    %254 = vector.extract_strided_slice %251 {offsets = [0, 16], sizes = [8, 8], strides = [1, 1]} : vector<8x24xf32> to vector<8x8xf32>
    %cst_85 = arith.constant dense<0.000000e+00> : vector<8x8xf32>
    %255 = tpu.matmul %252, %253, %cst_85 {dimension_numbers = #tpu.dot_dimension_numbers<[1], [1], [0], [0], [0, 0, 1, 0], [], []>} : vector<8x8xf32>, vector<8x8xf32>, vector<8x8xf32> -> vector<8x8xf32>
    %cst_86 = arith.constant dense<0xFF800000> : vector<8xf32>
    %256 = vector.multi_reduction <maximumf>, %255, %cst_86 [1] : vector<8x8xf32> to vector<8xf32>
    %257 = vector.shape_cast %256 : vector<8xf32> to vector<8x1xf32>
    %258 = vector.broadcast %257 : vector<8x1xf32> to vector<8x8xf32>
    %259 = arith.subf %255, %258 : vector<8x8xf32>
    %260 = math.exp %259 : vector<8x8xf32>
    %cst_87 = arith.constant dense<0.000000e+00> : vector<8xf32>
    %261 = vector.multi_reduction <add>, %260, %cst_87 [1] : vector<8x8xf32> to vector<8xf32>
    %262 = vector.shape_cast %261 : vector<8xf32> to vector<8x1xf32>
    %263 = tpu.reciprocal %262 : vector<8x1xf32> -> vector<8x1xf32>
    %264 = vector.broadcast %263 : vector<8x1xf32> to vector<8x8xf32>
    %265 = arith.mulf %260, %264 : vector<8x8xf32>
    %cst_88 = arith.constant dense<0.000000e+00> : vector<8x8xf32>
    %266 = tpu.matmul %265, %254, %cst_88 {dimension_numbers = #tpu.dot_dimension_numbers<[1], [0], [0], [1], [0, 0, 1, 1], [], []>} : vector<8x8xf32>, vector<8x8xf32>, vector<8x8xf32> -> vector<8x8xf32>
    %267 = vector.extract_strided_slice %234 {offsets = [0, 48], sizes = [8, 24], strides = [1, 1]} : vector<16x96xf32> to vector<8x24xf32>
    %268 = vector.extract_strided_slice %267 {offsets = [0, 0], sizes = [8, 8], strides = [1, 1]} : vector<8x24xf32> to vector<8x8xf32>
    %269 = vector.extract_strided_slice %267 {offsets = [0, 8], sizes = [8, 8], strides = [1, 1]} : vector<8x24xf32> to vector<8x8xf32>
    %270 = vector.extract_strided_slice %267 {offsets = [0, 16], sizes = [8, 8], strides = [1, 1]} : vector<8x24xf32> to vector<8x8xf32>
    %cst_89 = arith.constant dense<0.000000e+00> : vector<8x8xf32>
    %271 = tpu.matmul %268, %269, %cst_89 {dimension_numbers = #tpu.dot_dimension_numbers<[1], [1], [0], [0], [0, 0, 1, 0], [], []>} : vector<8x8xf32>, vector<8x8xf32>, vector<8x8xf32> -> vector<8x8xf32>
    %cst_90 = arith.constant dense<0xFF800000> : vector<8xf32>
    %272 = vector.multi_reduction <maximumf>, %271, %cst_90 [1] : vector<8x8xf32> to vector<8xf32>
    %273 = vector.shape_cast %272 : vector<8xf32> to vector<8x1xf32>
    %274 = vector.broadcast %273 : vector<8x1xf32> to vector<8x8xf32>
    %275 = arith.subf %271, %274 : vector<8x8xf32>
    %276 = math.exp %275 : vector<8x8xf32>
    %cst_91 = arith.constant dense<0.000000e+00> : vector<8xf32>
    %277 = vector.multi_reduction <add>, %276, %cst_91 [1] : vector<8x8xf32> to vector<8xf32>
    %278 = vector.shape_cast %277 : vector<8xf32> to vector<8x1xf32>
    %279 = tpu.reciprocal %278 : vector<8x1xf32> -> vector<8x1xf32>
    %280 = vector.broadcast %279 : vector<8x1xf32> to vector<8x8xf32>
    %281 = arith.mulf %276, %280 : vector<8x8xf32>
    %cst_92 = arith.constant dense<0.000000e+00> : vector<8x8xf32>
    %282 = tpu.matmul %281, %270, %cst_92 {dimension_numbers = #tpu.dot_dimension_numbers<[1], [0], [0], [1], [0, 0, 1, 1], [], []>} : vector<8x8xf32>, vector<8x8xf32>, vector<8x8xf32> -> vector<8x8xf32>
    %283 = vector.extract_strided_slice %234 {offsets = [0, 72], sizes = [8, 24], strides = [1, 1]} : vector<16x96xf32> to vector<8x24xf32>
    %284 = vector.extract_strided_slice %283 {offsets = [0, 0], sizes = [8, 8], strides = [1, 1]} : vector<8x24xf32> to vector<8x8xf32>
    %285 = vector.extract_strided_slice %283 {offsets = [0, 8], sizes = [8, 8], strides = [1, 1]} : vector<8x24xf32> to vector<8x8xf32>
    %286 = vector.extract_strided_slice %283 {offsets = [0, 16], sizes = [8, 8], strides = [1, 1]} : vector<8x24xf32> to vector<8x8xf32>
    %cst_93 = arith.constant dense<0.000000e+00> : vector<8x8xf32>
    %287 = tpu.matmul %284, %285, %cst_93 {dimension_numbers = #tpu.dot_dimension_numbers<[1], [1], [0], [0], [0, 0, 1, 0], [], []>} : vector<8x8xf32>, vector<8x8xf32>, vector<8x8xf32> -> vector<8x8xf32>
    %cst_94 = arith.constant dense<0xFF800000> : vector<8xf32>
    %288 = vector.multi_reduction <maximumf>, %287, %cst_94 [1] : vector<8x8xf32> to vector<8xf32>
    %289 = vector.shape_cast %288 : vector<8xf32> to vector<8x1xf32>
    %290 = vector.broadcast %289 : vector<8x1xf32> to vector<8x8xf32>
    %291 = arith.subf %287, %290 : vector<8x8xf32>
    %292 = math.exp %291 : vector<8x8xf32>
    %cst_95 = arith.constant dense<0.000000e+00> : vector<8xf32>
    %293 = vector.multi_reduction <add>, %292, %cst_95 [1] : vector<8x8xf32> to vector<8xf32>
    %294 = vector.shape_cast %293 : vector<8xf32> to vector<8x1xf32>
    %295 = tpu.reciprocal %294 : vector<8x1xf32> -> vector<8x1xf32>
    %296 = vector.broadcast %295 : vector<8x1xf32> to vector<8x8xf32>
    %297 = arith.mulf %292, %296 : vector<8x8xf32>
    %cst_96 = arith.constant dense<0.000000e+00> : vector<8x8xf32>
    %298 = tpu.matmul %297, %286, %cst_96 {dimension_numbers = #tpu.dot_dimension_numbers<[1], [0], [0], [1], [0, 0, 1, 1], [], []>} : vector<8x8xf32>, vector<8x8xf32>, vector<8x8xf32> -> vector<8x8xf32>
    %299 = tpu.concatenate %250, %266, %282, %298 in 1 : vector<8x8xf32>, vector<8x8xf32>, vector<8x8xf32>, vector<8x8xf32> -> vector<8x32xf32>
    %300 = vector.extract_strided_slice %234 {offsets = [8, 0], sizes = [8, 24], strides = [1, 1]} : vector<16x96xf32> to vector<8x24xf32>
    %301 = vector.extract_strided_slice %300 {offsets = [0, 0], sizes = [8, 8], strides = [1, 1]} : vector<8x24xf32> to vector<8x8xf32>
    %302 = vector.extract_strided_slice %300 {offsets = [0, 8], sizes = [8, 8], strides = [1, 1]} : vector<8x24xf32> to vector<8x8xf32>
    %303 = vector.extract_strided_slice %300 {offsets = [0, 16], sizes = [8, 8], strides = [1, 1]} : vector<8x24xf32> to vector<8x8xf32>
    %cst_97 = arith.constant dense<0.000000e+00> : vector<8x8xf32>
    %304 = tpu.matmul %301, %302, %cst_97 {dimension_numbers = #tpu.dot_dimension_numbers<[1], [1], [0], [0], [0, 0, 1, 0], [], []>} : vector<8x8xf32>, vector<8x8xf32>, vector<8x8xf32> -> vector<8x8xf32>
    %cst_98 = arith.constant dense<0xFF800000> : vector<8xf32>
    %305 = vector.multi_reduction <maximumf>, %304, %cst_98 [1] : vector<8x8xf32> to vector<8xf32>
    %306 = vector.shape_cast %305 : vector<8xf32> to vector<8x1xf32>
    %307 = vector.broadcast %306 : vector<8x1xf32> to vector<8x8xf32>
    %308 = arith.subf %304, %307 : vector<8x8xf32>
    %309 = math.exp %308 : vector<8x8xf32>
    %cst_99 = arith.constant dense<0.000000e+00> : vector<8xf32>
    %310 = vector.multi_reduction <add>, %309, %cst_99 [1] : vector<8x8xf32> to vector<8xf32>
    %311 = vector.shape_cast %310 : vector<8xf32> to vector<8x1xf32>
    %312 = tpu.reciprocal %311 : vector<8x1xf32> -> vector<8x1xf32>
    %313 = vector.broadcast %312 : vector<8x1xf32> to vector<8x8xf32>
    %314 = arith.mulf %309, %313 : vector<8x8xf32>
    %cst_100 = arith.constant dense<0.000000e+00> : vector<8x8xf32>
    %315 = tpu.matmul %314, %303, %cst_100 {dimension_numbers = #tpu.dot_dimension_numbers<[1], [0], [0], [1], [0, 0, 1, 1], [], []>} : vector<8x8xf32>, vector<8x8xf32>, vector<8x8xf32> -> vector<8x8xf32>
    %316 = vector.extract_strided_slice %234 {offsets = [8, 24], sizes = [8, 24], strides = [1, 1]} : vector<16x96xf32> to vector<8x24xf32>
    %317 = vector.extract_strided_slice %316 {offsets = [0, 0], sizes = [8, 8], strides = [1, 1]} : vector<8x24xf32> to vector<8x8xf32>
    %318 = vector.extract_strided_slice %316 {offsets = [0, 8], sizes = [8, 8], strides = [1, 1]} : vector<8x24xf32> to vector<8x8xf32>
    %319 = vector.extract_strided_slice %316 {offsets = [0, 16], sizes = [8, 8], strides = [1, 1]} : vector<8x24xf32> to vector<8x8xf32>
    %cst_101 = arith.constant dense<0.000000e+00> : vector<8x8xf32>
    %320 = tpu.matmul %317, %318, %cst_101 {dimension_numbers = #tpu.dot_dimension_numbers<[1], [1], [0], [0], [0, 0, 1, 0], [], []>} : vector<8x8xf32>, vector<8x8xf32>, vector<8x8xf32> -> vector<8x8xf32>
    %cst_102 = arith.constant dense<0xFF800000> : vector<8xf32>
    %321 = vector.multi_reduction <maximumf>, %320, %cst_102 [1] : vector<8x8xf32> to vector<8xf32>
    %322 = vector.shape_cast %321 : vector<8xf32> to vector<8x1xf32>
    %323 = vector.broadcast %322 : vector<8x1xf32> to vector<8x8xf32>
    %324 = arith.subf %320, %323 : vector<8x8xf32>
    %325 = math.exp %324 : vector<8x8xf32>
    %cst_103 = arith.constant dense<0.000000e+00> : vector<8xf32>
    %326 = vector.multi_reduction <add>, %325, %cst_103 [1] : vector<8x8xf32> to vector<8xf32>
    %327 = vector.shape_cast %326 : vector<8xf32> to vector<8x1xf32>
    %328 = tpu.reciprocal %327 : vector<8x1xf32> -> vector<8x1xf32>
    %329 = vector.broadcast %328 : vector<8x1xf32> to vector<8x8xf32>
    %330 = arith.mulf %325, %329 : vector<8x8xf32>
    %cst_104 = arith.constant dense<0.000000e+00> : vector<8x8xf32>
    %331 = tpu.matmul %330, %319, %cst_104 {dimension_numbers = #tpu.dot_dimension_numbers<[1], [0], [0], [1], [0, 0, 1, 1], [], []>} : vector<8x8xf32>, vector<8x8xf32>, vector<8x8xf32> -> vector<8x8xf32>
    %332 = vector.extract_strided_slice %234 {offsets = [8, 48], sizes = [8, 24], strides = [1, 1]} : vector<16x96xf32> to vector<8x24xf32>
    %333 = vector.extract_strided_slice %332 {offsets = [0, 0], sizes = [8, 8], strides = [1, 1]} : vector<8x24xf32> to vector<8x8xf32>
    %334 = vector.extract_strided_slice %332 {offsets = [0, 8], sizes = [8, 8], strides = [1, 1]} : vector<8x24xf32> to vector<8x8xf32>
    %335 = vector.extract_strided_slice %332 {offsets = [0, 16], sizes = [8, 8], strides = [1, 1]} : vector<8x24xf32> to vector<8x8xf32>
    %cst_105 = arith.constant dense<0.000000e+00> : vector<8x8xf32>
    %336 = tpu.matmul %333, %334, %cst_105 {dimension_numbers = #tpu.dot_dimension_numbers<[1], [1], [0], [0], [0, 0, 1, 0], [], []>} : vector<8x8xf32>, vector<8x8xf32>, vector<8x8xf32> -> vector<8x8xf32>
    %cst_106 = arith.constant dense<0xFF800000> : vector<8xf32>
    %337 = vector.multi_reduction <maximumf>, %336, %cst_106 [1] : vector<8x8xf32> to vector<8xf32>
    %338 = vector.shape_cast %337 : vector<8xf32> to vector<8x1xf32>
    %339 = vector.broadcast %338 : vector<8x1xf32> to vector<8x8xf32>
    %340 = arith.subf %336, %339 : vector<8x8xf32>
    %341 = math.exp %340 : vector<8x8xf32>
    %cst_107 = arith.constant dense<0.000000e+00> : vector<8xf32>
    %342 = vector.multi_reduction <add>, %341, %cst_107 [1] : vector<8x8xf32> to vector<8xf32>
    %343 = vector.shape_cast %342 : vector<8xf32> to vector<8x1xf32>
    %344 = tpu.reciprocal %343 : vector<8x1xf32> -> vector<8x1xf32>
    %345 = vector.broadcast %344 : vector<8x1xf32> to vector<8x8xf32>
    %346 = arith.mulf %341, %345 : vector<8x8xf32>
    %cst_108 = arith.constant dense<0.000000e+00> : vector<8x8xf32>
    %347 = tpu.matmul %346, %335, %cst_108 {dimension_numbers = #tpu.dot_dimension_numbers<[1], [0], [0], [1], [0, 0, 1, 1], [], []>} : vector<8x8xf32>, vector<8x8xf32>, vector<8x8xf32> -> vector<8x8xf32>
    %348 = vector.extract_strided_slice %234 {offsets = [8, 72], sizes = [8, 24], strides = [1, 1]} : vector<16x96xf32> to vector<8x24xf32>
    %349 = vector.extract_strided_slice %348 {offsets = [0, 0], sizes = [8, 8], strides = [1, 1]} : vector<8x24xf32> to vector<8x8xf32>
    %350 = vector.extract_strided_slice %348 {offsets = [0, 8], sizes = [8, 8], strides = [1, 1]} : vector<8x24xf32> to vector<8x8xf32>
    %351 = vector.extract_strided_slice %348 {offsets = [0, 16], sizes = [8, 8], strides = [1, 1]} : vector<8x24xf32> to vector<8x8xf32>
    %cst_109 = arith.constant dense<0.000000e+00> : vector<8x8xf32>
    %352 = tpu.matmul %349, %350, %cst_109 {dimension_numbers = #tpu.dot_dimension_numbers<[1], [1], [0], [0], [0, 0, 1, 0], [], []>} : vector<8x8xf32>, vector<8x8xf32>, vector<8x8xf32> -> vector<8x8xf32>
    %cst_110 = arith.constant dense<0xFF800000> : vector<8xf32>
    %353 = vector.multi_reduction <maximumf>, %352, %cst_110 [1] : vector<8x8xf32> to vector<8xf32>
    %354 = vector.shape_cast %353 : vector<8xf32> to vector<8x1xf32>
    %355 = vector.broadcast %354 : vector<8x1xf32> to vector<8x8xf32>
    %356 = arith.subf %352, %355 : vector<8x8xf32>
    %357 = math.exp %356 : vector<8x8xf32>
    %cst_111 = arith.constant dense<0.000000e+00> : vector<8xf32>
    %358 = vector.multi_reduction <add>, %357, %cst_111 [1] : vector<8x8xf32> to vector<8xf32>
    %359 = vector.shape_cast %358 : vector<8xf32> to vector<8x1xf32>
    %360 = tpu.reciprocal %359 : vector<8x1xf32> -> vector<8x1xf32>
    %361 = vector.broadcast %360 : vector<8x1xf32> to vector<8x8xf32>
    %362 = arith.mulf %357, %361 : vector<8x8xf32>
    %cst_112 = arith.constant dense<0.000000e+00> : vector<8x8xf32>
    %363 = tpu.matmul %362, %351, %cst_112 {dimension_numbers = #tpu.dot_dimension_numbers<[1], [0], [0], [1], [0, 0, 1, 1], [], []>} : vector<8x8xf32>, vector<8x8xf32>, vector<8x8xf32> -> vector<8x8xf32>
    %364 = tpu.concatenate %315, %331, %347, %363 in 1 : vector<8x8xf32>, vector<8x8xf32>, vector<8x8xf32>, vector<8x8xf32> -> vector<8x32xf32>
    %365 = tpu.concatenate %299, %364 in 0 : vector<8x32xf32>, vector<8x32xf32> -> vector<16x32xf32>
    %cst_113 = arith.constant dense<0.000000e+00> : vector<16x32xf32>
    %366 = tpu.matmul %365, %217, %cst_113 {dimension_numbers = #tpu.dot_dimension_numbers<[1], [0], [0], [1], [0, 0, 1, 1], [], []>} : vector<16x32xf32>, vector<32x32xf32>, vector<16x32xf32> -> vector<16x32xf32>
    %367 = vector.broadcast %225 : vector<1x32xf32> to vector<16x32xf32>
    %368 = arith.addf %366, %367 : vector<16x32xf32>
    %369 = arith.addf %368, %213 : vector<16x32xf32>
    %cst_114 = arith.constant dense<0.000000e+00> : vector<16xf32>
    %370 = vector.multi_reduction <add>, %369, %cst_114 [1] : vector<16x32xf32> to vector<16xf32>
    %371 = vector.shape_cast %370 : vector<16xf32> to vector<16x1xf32>
    %cst_115 = arith.constant 3.200000e+01 : f32
    %372 = vector.broadcast %cst_115 : f32 to vector<16x1xf32>
    %373 = arith.divf %371, %372 : vector<16x1xf32>
    %374 = vector.broadcast %373 : vector<16x1xf32> to vector<16x32xf32>
    %375 = arith.subf %369, %374 : vector<16x32xf32>
    %376 = arith.mulf %375, %375 : vector<16x32xf32>
    %cst_116 = arith.constant dense<0.000000e+00> : vector<16xf32>
    %377 = vector.multi_reduction <add>, %376, %cst_116 [1] : vector<16x32xf32> to vector<16xf32>
    %378 = vector.shape_cast %377 : vector<16xf32> to vector<16x1xf32>
    %cst_117 = arith.constant 3.200000e+01 : f32
    %379 = vector.broadcast %cst_117 : f32 to vector<16x1xf32>
    %380 = arith.divf %378, %379 : vector<16x1xf32>
    %381 = vector.broadcast %373 : vector<16x1xf32> to vector<16x32xf32>
    %382 = arith.subf %369, %381 : vector<16x32xf32>
    %cst_118 = arith.constant 9.99999996E-13 : f32
    %383 = vector.broadcast %cst_118 : f32 to vector<16x1xf32>
    %384 = arith.addf %380, %383 : vector<16x1xf32>
    %385 = math.rsqrt %384 : vector<16x1xf32>
    %386 = vector.broadcast %385 : vector<16x1xf32> to vector<16x32xf32>
    %387 = arith.mulf %382, %386 : vector<16x32xf32>
    %388 = vector.broadcast %226 : vector<1x32xf32> to vector<16x32xf32>
    %389 = arith.mulf %387, %388 : vector<16x32xf32>
    %390 = vector.broadcast %227 : vector<1x32xf32> to vector<16x32xf32>
    %391 = arith.addf %389, %390 : vector<16x32xf32>
    %cst_119 = arith.constant dense<0.000000e+00> : vector<16x64xf32>
    %392 = tpu.matmul %391, %219, %cst_119 {dimension_numbers = #tpu.dot_dimension_numbers<[1], [0], [0], [1], [0, 0, 1, 1], [], []>} : vector<16x32xf32>, vector<32x64xf32>, vector<16x64xf32> -> vector<16x64xf32>
    %393 = vector.broadcast %228 : vector<1x64xf32> to vector<16x64xf32>
    %394 = arith.addf %392, %393 : vector<16x64xf32>
    %cst_120 = arith.constant 0.000000e+00 : f32
    %395 = vector.broadcast %cst_120 : f32 to vector<16x64xf32>
    %396 = arith.maximumf %394, %395 : vector<16x64xf32>
    %cst_121 = arith.constant dense<0.000000e+00> : vector<16x32xf32>
    %397 = tpu.matmul %396, %221, %cst_121 {dimension_numbers = #tpu.dot_dimension_numbers<[1], [0], [0], [1], [0, 0, 1, 1], [], []>} : vector<16x64xf32>, vector<64x32xf32>, vector<16x32xf32> -> vector<16x32xf32>
    %398 = vector.broadcast %229 : vector<1x32xf32> to vector<16x32xf32>
    %399 = arith.addf %397, %398 : vector<16x32xf32>
    %400 = arith.addf %399, %391 : vector<16x32xf32>
    %cst_122 = arith.constant dense<0.000000e+00> : vector<16xf32>
    %401 = vector.multi_reduction <add>, %400, %cst_122 [1] : vector<16x32xf32> to vector<16xf32>
    %402 = vector.shape_cast %401 : vector<16xf32> to vector<16x1xf32>
    %cst_123 = arith.constant 3.200000e+01 : f32
    %403 = vector.broadcast %cst_123 : f32 to vector<16x1xf32>
    %404 = arith.divf %402, %403 : vector<16x1xf32>
    %405 = vector.broadcast %404 : vector<16x1xf32> to vector<16x32xf32>
    %406 = arith.subf %400, %405 : vector<16x32xf32>
    %407 = arith.mulf %406, %406 : vector<16x32xf32>
    %cst_124 = arith.constant dense<0.000000e+00> : vector<16xf32>
    %408 = vector.multi_reduction <add>, %407, %cst_124 [1] : vector<16x32xf32> to vector<16xf32>
    %409 = vector.shape_cast %408 : vector<16xf32> to vector<16x1xf32>
    %cst_125 = arith.constant 3.200000e+01 : f32
    %410 = vector.broadcast %cst_125 : f32 to vector<16x1xf32>
    %411 = arith.divf %409, %410 : vector<16x1xf32>
    %412 = vector.broadcast %404 : vector<16x1xf32> to vector<16x32xf32>
    %413 = arith.subf %400, %412 : vector<16x32xf32>
    %cst_126 = arith.constant 9.99999996E-13 : f32
    %414 = vector.broadcast %cst_126 : f32 to vector<16x1xf32>
    %415 = arith.addf %411, %414 : vector<16x1xf32>
    %416 = math.rsqrt %415 : vector<16x1xf32>
    %417 = vector.broadcast %416 : vector<16x1xf32> to vector<16x32xf32>
    %418 = arith.mulf %413, %417 : vector<16x32xf32>
    %419 = vector.broadcast %230 : vector<1x32xf32> to vector<16x32xf32>
    %420 = arith.mulf %418, %419 : vector<16x32xf32>
    %421 = vector.broadcast %231 : vector<1x32xf32> to vector<16x32xf32>
    %422 = arith.addf %420, %421 : vector<16x32xf32>
    %c0_127 = arith.constant 0 : index
    %c0_128 = arith.constant 0 : index
    %423 = vector.load %arg7[%c0_127, %c0_128] : memref<32x16xf32, #tpu.memory_space<vmem>>, vector<32x16xf32>
    %cst_129 = arith.constant dense<0.000000e+00> : vector<16x16xf32>
    %424 = tpu.matmul %422, %423, %cst_129 {dimension_numbers = #tpu.dot_dimension_numbers<[1], [0], [0], [1], [0, 0, 1, 1], [], []>} : vector<16x32xf32>, vector<32x16xf32>, vector<16x16xf32> -> vector<16x16xf32>
    %c0_130 = arith.constant 0 : index
    %c0_131 = arith.constant 0 : index
    %425 = vector.load %arg8[%c0_130, %c0_131] : memref<1x16xf32, #tpu.memory_space<vmem>>, vector<1x16xf32>
    %426 = vector.broadcast %425 : vector<1x16xf32> to vector<16x16xf32>
    %427 = arith.addf %424, %426 : vector<16x16xf32>
    %428 = vector.extract_strided_slice %427 {offsets = [0, 0], sizes = [1, 16], strides = [1, 1]} : vector<16x16xf32> to vector<1x16xf32>
    %429 = vector.extract_strided_slice %427 {offsets = [1, 0], sizes = [1, 16], strides = [1, 1]} : vector<16x16xf32> to vector<1x16xf32>
    %430 = vector.extract_strided_slice %427 {offsets = [2, 0], sizes = [1, 16], strides = [1, 1]} : vector<16x16xf32> to vector<1x16xf32>
    %431 = vector.extract_strided_slice %427 {offsets = [3, 0], sizes = [1, 16], strides = [1, 1]} : vector<16x16xf32> to vector<1x16xf32>
    %432 = vector.extract_strided_slice %427 {offsets = [4, 0], sizes = [1, 16], strides = [1, 1]} : vector<16x16xf32> to vector<1x16xf32>
    %433 = vector.extract_strided_slice %427 {offsets = [5, 0], sizes = [1, 16], strides = [1, 1]} : vector<16x16xf32> to vector<1x16xf32>
    %434 = vector.extract_strided_slice %427 {offsets = [6, 0], sizes = [1, 16], strides = [1, 1]} : vector<16x16xf32> to vector<1x16xf32>
    %435 = vector.extract_strided_slice %427 {offsets = [7, 0], sizes = [1, 16], strides = [1, 1]} : vector<16x16xf32> to vector<1x16xf32>
    %436 = tpu.concatenate %428, %429, %430, %431, %432, %433, %434, %435 in 1 : vector<1x16xf32>, vector<1x16xf32>, vector<1x16xf32>, vector<1x16xf32>, vector<1x16xf32>, vector<1x16xf32>, vector<1x16xf32>, vector<1x16xf32> -> vector<1x128xf32>
    %437 = vector.extract_strided_slice %427 {offsets = [8, 0], sizes = [1, 16], strides = [1, 1]} : vector<16x16xf32> to vector<1x16xf32>
    %438 = vector.extract_strided_slice %427 {offsets = [9, 0], sizes = [1, 16], strides = [1, 1]} : vector<16x16xf32> to vector<1x16xf32>
    %439 = vector.extract_strided_slice %427 {offsets = [10, 0], sizes = [1, 16], strides = [1, 1]} : vector<16x16xf32> to vector<1x16xf32>
    %440 = vector.extract_strided_slice %427 {offsets = [11, 0], sizes = [1, 16], strides = [1, 1]} : vector<16x16xf32> to vector<1x16xf32>
    %441 = vector.extract_strided_slice %427 {offsets = [12, 0], sizes = [1, 16], strides = [1, 1]} : vector<16x16xf32> to vector<1x16xf32>
    %442 = vector.extract_strided_slice %427 {offsets = [13, 0], sizes = [1, 16], strides = [1, 1]} : vector<16x16xf32> to vector<1x16xf32>
    %443 = vector.extract_strided_slice %427 {offsets = [14, 0], sizes = [1, 16], strides = [1, 1]} : vector<16x16xf32> to vector<1x16xf32>
    %444 = vector.extract_strided_slice %427 {offsets = [15, 0], sizes = [1, 16], strides = [1, 1]} : vector<16x16xf32> to vector<1x16xf32>
    %445 = tpu.concatenate %437, %438, %439, %440, %441, %442, %443, %444 in 1 : vector<1x16xf32>, vector<1x16xf32>, vector<1x16xf32>, vector<1x16xf32>, vector<1x16xf32>, vector<1x16xf32>, vector<1x16xf32>, vector<1x16xf32> -> vector<1x128xf32>
    %446 = tpu.concatenate %436, %445 in 0 : vector<1x128xf32>, vector<1x128xf32> -> vector<2x128xf32>
    %c0_132 = arith.constant 0 : index
    %c0_133 = arith.constant 0 : index
    %447 = vector.load %arg9[%c0_132, %c0_133] : memref<2x128xf32, #tpu.memory_space<vmem>>, vector<2x128xf32>
    tpu.vector_store %arg9[%c0_132, %c0_133], %446 {strides = array<i32>} : memref<2x128xf32, #tpu.memory_space<vmem>>, vector<2x128xf32>,
    return
  }
  func.func @transform_0(%arg0: i32) -> (i32, i32, i32) {
    %c0_i32 = arith.constant 0 : i32
    %c0_i32_0 = arith.constant 0 : i32
    %c0_i32_1 = arith.constant 0 : i32
    %c0_i32_2 = arith.constant 0 : i32
    return %c0_i32, %c0_i32_0, %c0_i32_1 : i32, i32, i32
  }
  func.func @transform_1(%arg0: i32) -> (i32, i32, i32) {
    %c0_i32 = arith.constant 0 : i32
    %c0_i32_0 = arith.constant 0 : i32
    %c0_i32_1 = arith.constant 0 : i32
    %c0_i32_2 = arith.constant 0 : i32
    return %c0_i32, %c0_i32_0, %c0_i32_1 : i32, i32, i32
  }
  func.func @transform_2(%arg0: i32) -> (i32, i32, i32) {
    %c0_i32 = arith.constant 0 : i32
    %c0_i32_0 = arith.constant 0 : i32
    %c0_i32_1 = arith.constant 0 : i32
    %c0_i32_2 = arith.constant 0 : i32
    return %c0_i32, %c0_i32_0, %c0_i32_1 : i32, i32, i32
  }
  func.func @transform_3(%arg0: i32) -> (i32, i32, i32) {
    %c0_i32 = arith.constant 0 : i32
    %c0_i32_0 = arith.constant 0 : i32
    %c0_i32_1 = arith.constant 0 : i32
    %c0_i32_2 = arith.constant 0 : i32
    return %c0_i32, %c0_i32_0, %c0_i32_1 : i32, i32, i32
  }
  func.func @transform_4(%arg0: i32) -> (i32, i32, i32) {
    %c0_i32 = arith.constant 0 : i32
    %c0_i32_0 = arith.constant 0 : i32
    %c0_i32_1 = arith.constant 0 : i32
    %c0_i32_2 = arith.constant 0 : i32
    return %c0_i32, %c0_i32_0, %c0_i32_1 : i32, i32, i32
  }
  func.func @transform_5(%arg0: i32) -> (i32, i32, i32) {
    %c0_i32 = arith.constant 0 : i32
    %c0_i32_0 = arith.constant 0 : i32
    %c0_i32_1 = arith.constant 0 : i32
    %c0_i32_2 = arith.constant 0 : i32
    return %c0_i32, %c0_i32_0, %c0_i32_1 : i32, i32, i32
  }
  func.func @transform_6(%arg0: i32) -> (i32, i32) {
    %c0_i32 = arith.constant 0 : i32
    %c0_i32_0 = arith.constant 0 : i32
    %c0_i32_1 = arith.constant 0 : i32
    return %c0_i32, %c0_i32_0 : i32, i32
  }
  func.func @transform_7(%arg0: i32) -> (i32, i32) {
    %c0_i32 = arith.constant 0 : i32
    %c0_i32_0 = arith.constant 0 : i32
    %c0_i32_1 = arith.constant 0 : i32
    return %c0_i32, %c0_i32_0 : i32, i32
  }
  func.func @transform_8(%arg0: i32) -> (i32, i32) {
    %c0_i32 = arith.constant 0 : i32
    %c0_i32_0 = arith.constant 0 : i32
    %c0_i32_1 = arith.constant 0 : i32
    return %c0_i32, %c0_i32_0 : i32, i32
  }
}

</mosaic_0001>

<llo_original>
// kernel: tpu_custom_call.1
$region0: #{tpu_custom_call.1}
  #allocation0 [shape = 'u32[]', space=smem, size = 0x4, offset = 0x4, fixed_abs, tag = 'smem constant byte address 0x4 - core index']
  #allocation1 [shape = 'u32[72,128]{1,0:T(1,128)}', space=vmem, size = 0x9000, scoped, tag = 'internal scratch']
  %s0 = inlined_call_operand.vmem [shape: f32[2,8,32], index: 0, kind: input, shape index: {}]
  %s1 = inlined_call_operand.vmem [shape: f32[2,32,96], index: 1, kind: input, shape index: {}]
  %s2 = inlined_call_operand.vmem [shape: f32[2,32,32], index: 2, kind: input, shape index: {}]
  %s3 = inlined_call_operand.vmem [shape: f32[2,32,64], index: 3, kind: input, shape index: {}]
  %s4 = inlined_call_operand.vmem [shape: f32[2,64,32], index: 4, kind: input, shape index: {}]
  %s5 = inlined_call_operand.vmem [shape: f32[2,8,96], index: 5, kind: input, shape index: {}]
  %s6 = inlined_call_operand.vmem [shape: f32[32,16], index: 6, kind: input, shape index: {}]
  %s7 = inlined_call_operand.vmem [shape: f32[1,16], index: 7, kind: input, shape index: {}]
  %s8 = inlined_call_operand.hbm [shape: f32[2,128], index: 8, kind: output, shape index: {}]
  %s9 = sld [smem:[#allocation0]]
  $region42: #{tpu_custom_call.1} parent=0
    _
  %s11 = ssub.s32 1, %s9
  %s12 = scalar_select 0, %s11, %s9
  $region1: #{tpu_custom_call.1} parent=0
    #allocation2 [shape = 'u8[1024]{0}', space=vmem, size = 0x400, scoped, tag = 'output window, operand 0, single buffered']
    #allocation3 [shape = 's32[1]{0}', space=sflag, size = 0x4, scoped, tag = 'scoped memory for tpu_custom_call.1']
    %13 = vsyncpa [#allocation3], 0
    // Predicated region
    $region2: #{tpu_custom_call.1} parent=1 // pred_check
      _
    $region3: #{tpu_custom_call.1} parent=1 // pred_check_branch
      %15 = sbr.rel (0) target = $region5
    $region4: #{tpu_custom_call.1} parent=1 // pred_region
      _
    $region5: #{tpu_custom_call.1} parent=1 // pred_fallthru
      _
    // Predicated region
    $region6: #{tpu_custom_call.1} parent=1 // pred_check
      _
    $region7: #{tpu_custom_call.1} parent=1 // pred_check_branch
      %17 = sbr.rel (0) target = $region9
    $region8: #{tpu_custom_call.1} parent=1 // pred_region
      _
    $region9: #{tpu_custom_call.1} parent=1 // pred_fallthru
      _
    // Predicated region
    $region10: #{tpu_custom_call.1} parent=1 // pred_check
      _
    $region11: #{tpu_custom_call.1} parent=1 // pred_check_branch
      %19 = sbr.rel (0) target = $region13
    $region12: #{tpu_custom_call.1} parent=1 // pred_region
      _
    $region13: #{tpu_custom_call.1} parent=1 // pred_fallthru
      _
    // Predicated region
    $region14: #{tpu_custom_call.1} parent=1 // pred_check
      _
    $region15: #{tpu_custom_call.1} parent=1 // pred_check_branch
      %21 = sbr.rel (0) target = $region17
    $region16: #{tpu_custom_call.1} parent=1 // pred_region
      _
    $region17: #{tpu_custom_call.1} parent=1 // pred_fallthru
      _
    // Predicated region
    $region18: #{tpu_custom_call.1} parent=1 // pred_check
      _
    $region19: #{tpu_custom_call.1} parent=1 // pred_check_branch
      %23 = sbr.rel (0) target = $region21
    $region20: #{tpu_custom_call.1} parent=1 // pred_region
      _
    $region21: #{tpu_custom_call.1} parent=1 // pred_fallthru
      _
    // Predicated region
    $region22: #{tpu_custom_call.1} parent=1 // pred_check
      _
    $region23: #{tpu_custom_call.1} parent=1 // pred_check_branch
      %25 = sbr.rel (0) target = $region25
    $region24: #{tpu_custom_call.1} parent=1 // pred_region
      _
    $region25: #{tpu_custom_call.1} parent=1 // pred_fallthru
      _
    // Predicated region
    $region26: #{tpu_custom_call.1} parent=1 // pred_check
      _
    $region27: #{tpu_custom_call.1} parent=1 // pred_check_branch
      %27 = sbr.rel (0) target = $region29
    $region28: #{tpu_custom_call.1} parent=1 // pred_region
      _
    $region29: #{tpu_custom_call.1} parent=1 // pred_fallthru
      _
    // Predicated region
    $region30: #{tpu_custom_call.1} parent=1 // pred_check
      _
    $region31: #{tpu_custom_call.1} parent=1 // pred_check_branch
      %29 = sbr.rel (0) target = $region33
    $region32: #{tpu_custom_call.1} parent=1 // pred_region
      _
    $region33: #{tpu_custom_call.1} parent=1 // pred_fallthru
      _
    %v30 = vld [vmem:[%s0] sm:$0xff]
    %s31 = scalar_lea.vmem %s0, 8
    %v32 = vld [vmem:[%s31] sm:$0xff]
    %v33 = vld [vmem:[%s1] sm:$0xff]
    %v34 = vld [vmem:[%s1 + $0x8] sm:$0xff]
    %v35 = vld [vmem:[%s1 + $0x10] sm:$0xff]
    %v36 = vld [vmem:[%s1 + $0x18] sm:$0xff]
    %v37 = vld [vmem:[%s2] sm:$0xff]
    %v38 = vld [vmem:[%s2 + $0x8] sm:$0xff]
    %v39 = vld [vmem:[%s2 + $0x10] sm:$0xff]
    %v40 = vld [vmem:[%s2 + $0x18] sm:$0xff]
    %v41 = vld [vmem:[%s3] sm:$0xff]
    %v42 = vld [vmem:[%s3 + $0x8] sm:$0xff]
    %v43 = vld [vmem:[%s3 + $0x10] sm:$0xff]
    %v44 = vld [vmem:[%s3 + $0x18] sm:$0xff]
    %v45 = vld [vmem:[%s4] sm:$0xff]
    %v46 = vld [vmem:[%s4 + $0x8] sm:$0xff]
    %v47 = vld [vmem:[%s4 + $0x10] sm:$0xff]
    %v48 = vld [vmem:[%s4 + $0x18] sm:$0xff]
    %v49 = vld [vmem:[%s4 + $0x20] sm:$0xff]
    %v50 = vld [vmem:[%s4 + $0x28] sm:$0xff]
    %v51 = vld [vmem:[%s4 + $0x30] sm:$0xff]
    %v52 = vld [vmem:[%s4 + $0x38] sm:$0xff]
    %v53 = vld [vmem:[%s5] sm:$0xff]
    %v54 = vperm.slane %v53, 0
    %vm55 = vcmask 261120
    %v57 = vsel %vm55, %v30, 0
    %v60 = vsel %vm55, %v32, 0
    %62 = vmatpush.msra.mxu0 0.0
    %63 = vmatpush.msra.mxu0 0.0
    %64 = vmatpush.msra.mxu0 0.0
    %65 = vmatpush.msra.mxu0 0.0
    %66 = vmatpush.msra.mxu0 0.0
    %67 = vmatpush.msra.mxu0 0.0
    %68 = vmatpush.msra.mxu0 0.0
    %69 = vmatpush.msra.mxu0 0.0
    %70 = vmatpush.msra.mxu0 0.0
    %71 = vmatpush.msra.mxu0 0.0
    %72 = vmatpush.msra.mxu0 0.0
    %73 = vmatpush.msra.mxu0 0.0
    %74 = vmatpush.msra.mxu0 %v36
    %75 = vmatpush.msra.mxu0 %v35
    %76 = vmatpush.msra.mxu0 %v34
    %77 = vmatpush.msra.mxu0 %v33
    %78 = vmatmul.f32.gmra.mxu0 %v57
    %v79 = vpop.f32.mrf.mxu0
    %v80 = vadd.f32 %v54, %v79
    %81 = vmatmul.f32.gmra.mxu0 %v60
    %v82 = vpop.f32.mrf.mxu0
    %v83 = vadd.f32 %v54, %v82
    %84 = vdwg.mxu0
    %86 = vrot.lane.b32.xlu0 %v80, 120
    %v87 = vpop.permute.xlu0 %86
    %vm88 = vcmask 64512
    %v89 = vsel %vm88, %v80, 0
    %v91 = vsel %vm88, %v87, 0
    %93 = vmatpush.xpose.msra.mxu0 0.0
    %94 = vmatpush.xpose.msra.mxu0 0.0
    %95 = vmatpush.xpose.msra.mxu0 0.0
    %96 = vmatpush.xpose.msra.mxu0 0.0
    %97 = vmatpush.xpose.msra.mxu0 0.0
    %98 = vmatpush.xpose.msra.mxu0 0.0
    %99 = vmatpush.xpose.msra.mxu0 0.0
    %100 = vmatpush.xpose.msra.mxu0 0.0
    %101 = vmatpush.xpose.msra.mxu0 0.0
    %102 = vmatpush.xpose.msra.mxu0 0.0
    %103 = vmatpush.xpose.msra.mxu0 0.0
    %104 = vmatpush.xpose.msra.mxu0 0.0
    %105 = vmatpush.xpose.msra.mxu0 0.0
    %106 = vmatpush.xpose.msra.mxu0 0.0
    %107 = vmatpush.xpose.msra.mxu0 0.0
    %108 = vmatpush.xpose.msra.mxu0 %v91
    %109 = vmatmul.f32.gmra.mxu0 %v89
    %v110 = vpop.f32.mrf.mxu0
    %v111 = vadd.f32 0.0, %v110
    %112 = vdwg.mxu0
    %v113 = vsel %vm88, %v111, -inf
    %114 = vmax.xlane.f32.xlu0 %v113
    %v115 = vpop.xlane.xlu0 %114
    %v116 = vsub.f32 %v111, %v115
    %v117 = vmul.f32 %v116, 1.442695
    %v118 = vpow.pop %v117
    %v119 = vsel %vm88, %v118, 0.0
    %120 = vadd.xlane.f32.xlu0 %v119
    %v121 = vpop.xlane.xlu0 %120
    %v122 = vrcp.pop %v121
    %v123 = vmul.f32 %v121, %v122
    %v124 = vsub.f32 1.0, %v123
    %v125 = vmul.f32 %v122, %v124
    %v126 = vadd.f32 %v122, %v125
    %vm127 = vweird.f32 %v121
    %vm128 = vweird.f32 %v122
    %vm129 = vmor %vm127, %vm128
    %v130 = vsel %vm129, %v122, %v126
    %v131 = vand.u32 2147483647, %v121
    %vm132 = vcmp.eq.f32.partialorder %v131, 8.507059e+37
    %v133 = vand.u32 %v121, 2147483648
    %v134 = vor.u32 1.1754944e-38, %v133
    %v135 = vsel %vm132, %v134, %v130
    %v136 = vmul.f32 %v118, %v135
    %137 = vrot.lane.b32.xlu0 %v80, 112
    %v138 = vpop.permute.xlu0 %137
    %v141 = vsel %vm88, %v136, 0
    %143 = vmatpush.msra.mxu0 0.0
    %144 = vmatpush.msra.mxu0 0.0
    %145 = vmatpush.msra.mxu0 0.0
    %146 = vmatpush.msra.mxu0 0.0
    %147 = vmatpush.msra.mxu0 0.0
    %148 = vmatpush.msra.mxu0 0.0
    %149 = vmatpush.msra.mxu0 0.0
    %150 = vmatpush.msra.mxu0 0.0
    %151 = vmatpush.msra.mxu0 0.0
    %152 = vmatpush.msra.mxu0 0.0
    %153 = vmatpush.msra.mxu0 0.0
    %154 = vmatpush.msra.mxu0 0.0
    %155 = vmatpush.msra.mxu0 0.0
    %156 = vmatpush.msra.mxu0 0.0
    %157 = vmatpush.msra.mxu0 0.0
    %158 = vmatpush.msra.mxu0 %v138
    %159 = vmatmul.f32.gmra.mxu0 %v141
    %v160 = vpop.f32.mrf.mxu0
    %v161 = vadd.f32 0.0, %v160
    %162 = vdwg.mxu0
    %163 = vrot.lane.b32.xlu0 %v80, 104
    %v164 = vpop.permute.xlu0 %163
    %165 = vrot.lane.b32.xlu0 %v80, 96
    %v166 = vpop.permute.xlu0 %165
    %v167 = vsel %vm88, %v164, 0
    %v169 = vsel %vm88, %v166, 0
    %171 = vmatpush.xpose.msra.mxu0 0.0
    %172 = vmatpush.xpose.msra.mxu0 0.0
    %173 = vmatpush.xpose.msra.mxu0 0.0
    %174 = vmatpush.xpose.msra.mxu0 0.0
    %175 = vmatpush.xpose.msra.mxu0 0.0
    %176 = vmatpush.xpose.msra.mxu0 0.0
    %177 = vmatpush.xpose.msra.mxu0 0.0
    %178 = vmatpush.xpose.msra.mxu0 0.0
    %179 = vmatpush.xpose.msra.mxu0 0.0
    %180 = vmatpush.xpose.msra.mxu0 0.0
    %181 = vmatpush.xpose.msra.mxu0 0.0
    %182 = vmatpush.xpose.msra.mxu0 0.0
    %183 = vmatpush.xpose.msra.mxu0 0.0
    %184 = vmatpush.xpose.msra.mxu0 0.0
    %185 = vmatpush.xpose.msra.mxu0 0.0
    %186 = vmatpush.xpose.msra.mxu0 %v169
    %187 = vmatmul.f32.gmra.mxu0 %v167
    %v188 = vpop.f32.mrf.mxu0
    %v189 = vadd.f32 0.0, %v188
    %190 = vdwg.mxu0
    %v191 = vsel %vm88, %v189, -inf
    %192 = vmax.xlane.f32.xlu0 %v191
    %v193 = vpop.xlane.xlu0 %192
    %v194 = vsub.f32 %v189, %v193
    %v195 = vmul.f32 %v194, 1.442695
    %v196 = vpow.pop %v195
    %v197 = vsel %vm88, %v196, 0.0
    %198 = vadd.xlane.f32.xlu0 %v197
    %v199 = vpop.xlane.xlu0 %198
    %v200 = vrcp.pop %v199
    %v201 = vmul.f32 %v199, %v200
    %v202 = vsub.f32 1.0, %v201
    %v203 = vmul.f32 %v200, %v202
    %v204 = vadd.f32 %v200, %v203
    %vm205 = vweird.f32 %v199
    %vm206 = vweird.f32 %v200
    %vm207 = vmor %vm205, %vm206
    %v208 = vsel %vm207, %v200, %v204
    %v209 = vand.u32 2147483647, %v199
    %vm210 = vcmp.eq.f32.partialorder %v209, 8.507059e+37
    %v211 = vand.u32 %v199, 2147483648
    %v212 = vor.u32 1.1754944e-38, %v211
    %v213 = vsel %vm210, %v212, %v208
    %v214 = vmul.f32 %v196, %v213
    %215 = vrot.lane.b32.xlu0 %v80, 88
    %v216 = vpop.permute.xlu0 %215
    %v219 = vsel %vm88, %v214, 0
    %221 = vmatpush.msra.mxu0 0.0
    %222 = vmatpush.msra.mxu0 0.0
    %223 = vmatpush.msra.mxu0 0.0
    %224 = vmatpush.msra.mxu0 0.0
    %225 = vmatpush.msra.mxu0 0.0
    %226 = vmatpush.msra.mxu0 0.0
    %227 = vmatpush.msra.mxu0 0.0
    %228 = vmatpush.msra.mxu0 0.0
    %229 = vmatpush.msra.mxu0 0.0
    %230 = vmatpush.msra.mxu0 0.0
    %231 = vmatpush.msra.mxu0 0.0
    %232 = vmatpush.msra.mxu0 0.0
    %233 = vmatpush.msra.mxu0 0.0
    %234 = vmatpush.msra.mxu0 0.0
    %235 = vmatpush.msra.mxu0 0.0
    %236 = vmatpush.msra.mxu0 %v216
    %237 = vmatmul.f32.gmra.mxu0 %v219
    %v238 = vpop.f32.mrf.mxu0
    %v239 = vadd.f32 0.0, %v238
    %240 = vdwg.mxu0
    %241 = vrot.lane.b32.xlu0 %v80, 80
    %v242 = vpop.permute.xlu0 %241
    %243 = vrot.lane.b32.xlu0 %v80, 72
    %v244 = vpop.permute.xlu0 %243
    %v245 = vsel %vm88, %v242, 0
    %v247 = vsel %vm88, %v244, 0
    %249 = vmatpush.xpose.msra.mxu0 0.0
    %250 = vmatpush.xpose.msra.mxu0 0.0
    %251 = vmatpush.xpose.msra.mxu0 0.0
    %252 = vmatpush.xpose.msra.mxu0 0.0
    %253 = vmatpush.xpose.msra.mxu0 0.0
    %254 = vmatpush.xpose.msra.mxu0 0.0
    %255 = vmatpush.xpose.msra.mxu0 0.0
    %256 = vmatpush.xpose.msra.mxu0 0.0
    %257 = vmatpush.xpose.msra.mxu0 0.0
    %258 = vmatpush.xpose.msra.mxu0 0.0
    %259 = vmatpush.xpose.msra.mxu0 0.0
    %260 = vmatpush.xpose.msra.mxu0 0.0
    %261 = vmatpush.xpose.msra.mxu0 0.0
    %262 = vmatpush.xpose.msra.mxu0 0.0
    %263 = vmatpush.xpose.msra.mxu0 0.0
    %264 = vmatpush.xpose.msra.mxu0 %v247
    %265 = vmatmul.f32.gmra.mxu0 %v245
    %v266 = vpop.f32.mrf.mxu0
    %v267 = vadd.f32 0.0, %v266
    %268 = vdwg.mxu0
    %v269 = vsel %vm88, %v267, -inf
    %270 = vmax.xlane.f32.xlu0 %v269
    %v271 = vpop.xlane.xlu0 %270
    %v272 = vsub.f32 %v267, %v271
    %v273 = vmul.f32 %v272, 1.442695
    %v274 = vpow.pop %v273
    %v275 = vsel %vm88, %v274, 0.0
    %276 = vadd.xlane.f32.xlu0 %v275
    %v277 = vpop.xlane.xlu0 %276
    %v278 = vrcp.pop %v277
    %v279 = vmul.f32 %v277, %v278
    %v280 = vsub.f32 1.0, %v279
    %v281 = vmul.f32 %v278, %v280
    %v282 = vadd.f32 %v278, %v281
    %vm283 = vweird.f32 %v277
    %vm284 = vweird.f32 %v278
    %vm285 = vmor %vm283, %vm284
    %v286 = vsel %vm285, %v278, %v282
    %v287 = vand.u32 2147483647, %v277
    %vm288 = vcmp.eq.f32.partialorder %v287, 8.507059e+37
    %v289 = vand.u32 %v277, 2147483648
    %v290 = vor.u32 1.1754944e-38, %v289
    %v291 = vsel %vm288, %v290, %v286
    %v292 = vmul.f32 %v274, %v291
    %293 = vrot.lane.b32.xlu0 %v80, 64
    %v294 = vpop.permute.xlu0 %293
    %v297 = vsel %vm88, %v292, 0
    %299 = vmatpush.msra.mxu0 0.0
    %300 = vmatpush.msra.mxu0 0.0
    %301 = vmatpush.msra.mxu0 0.0
    %302 = vmatpush.msra.mxu0 0.0
    %303 = vmatpush.msra.mxu0 0.0
    %304 = vmatpush.msra.mxu0 0.0
    %305 = vmatpush.msra.mxu0 0.0
    %306 = vmatpush.msra.mxu0 0.0
    %307 = vmatpush.msra.mxu0 0.0
    %308 = vmatpush.msra.mxu0 0.0
    %309 = vmatpush.msra.mxu0 0.0
    %310 = vmatpush.msra.mxu0 0.0
    %311 = vmatpush.msra.mxu0 0.0
    %312 = vmatpush.msra.mxu0 0.0
    %313 = vmatpush.msra.mxu0 0.0
    %314 = vmatpush.msra.mxu0 %v294
    %315 = vmatmul.f32.gmra.mxu0 %v297
    %v316 = vpop.f32.mrf.mxu0
    %v317 = vadd.f32 0.0, %v316
    %318 = vdwg.mxu0
    %319 = vrot.lane.b32.xlu0 %v80, 56
    %v320 = vpop.permute.xlu0 %319
    %321 = vrot.lane.b32.xlu0 %v80, 48
    %v322 = vpop.permute.xlu0 %321
    %v323 = vsel %vm88, %v320, 0
    %v325 = vsel %vm88, %v322, 0
    %327 = vmatpush.xpose.msra.mxu0 0.0
    %328 = vmatpush.xpose.msra.mxu0 0.0
    %329 = vmatpush.xpose.msra.mxu0 0.0
    %330 = vmatpush.xpose.msra.mxu0 0.0
    %331 = vmatpush.xpose.msra.mxu0 0.0
    %332 = vmatpush.xpose.msra.mxu0 0.0
    %333 = vmatpush.xpose.msra.mxu0 0.0
    %334 = vmatpush.xpose.msra.mxu0 0.0
    %335 = vmatpush.xpose.msra.mxu0 0.0
    %336 = vmatpush.xpose.msra.mxu0 0.0
    %337 = vmatpush.xpose.msra.mxu0 0.0
    %338 = vmatpush.xpose.msra.mxu0 0.0
    %339 = vmatpush.xpose.msra.mxu0 0.0
    %340 = vmatpush.xpose.msra.mxu0 0.0
    %341 = vmatpush.xpose.msra.mxu0 0.0
    %342 = vmatpush.xpose.msra.mxu0 %v325
    %343 = vmatmul.f32.gmra.mxu0 %v323
    %v344 = vpop.f32.mrf.mxu0
    %v345 = vadd.f32 0.0, %v344
    %346 = vdwg.mxu0
    %v347 = vsel %vm88, %v345, -inf
    %348 = vmax.xlane.f32.xlu0 %v347
    %v349 = vpop.xlane.xlu0 %348
    %v350 = vsub.f32 %v345, %v349
    %v351 = vmul.f32 %v350, 1.442695
    %v352 = vpow.pop %v351
    %v353 = vsel %vm88, %v352, 0.0
    %354 = vadd.xlane.f32.xlu0 %v353
    %v355 = vpop.xlane.xlu0 %354
    %v356 = vrcp.pop %v355
    %v357 = vmul.f32 %v355, %v356
    %v358 = vsub.f32 1.0, %v357
    %v359 = vmul.f32 %v356, %v358
    %v360 = vadd.f32 %v356, %v359
    %vm361 = vweird.f32 %v355
    %vm362 = vweird.f32 %v356
    %vm363 = vmor %vm361, %vm362
    %v364 = vsel %vm363, %v356, %v360
    %v365 = vand.u32 2147483647, %v355
    %vm366 = vcmp.eq.f32.partialorder %v365, 8.507059e+37
    %v367 = vand.u32 %v355, 2147483648
    %v368 = vor.u32 1.1754944e-38, %v367
    %v369 = vsel %vm366, %v368, %v364
    %v370 = vmul.f32 %v352, %v369
    %371 = vrot.lane.b32.xlu0 %v80, 40
    %v372 = vpop.permute.xlu0 %371
    %v375 = vsel %vm88, %v370, 0
    %377 = vmatpush.msra.mxu0 0.0
    %378 = vmatpush.msra.mxu0 0.0
    %379 = vmatpush.msra.mxu0 0.0
    %380 = vmatpush.msra.mxu0 0.0
    %381 = vmatpush.msra.mxu0 0.0
    %382 = vmatpush.msra.mxu0 0.0
    %383 = vmatpush.msra.mxu0 0.0
    %384 = vmatpush.msra.mxu0 0.0
    %385 = vmatpush.msra.mxu0 0.0
    %386 = vmatpush.msra.mxu0 0.0
    %387 = vmatpush.msra.mxu0 0.0
    %388 = vmatpush.msra.mxu0 0.0
    %389 = vmatpush.msra.mxu0 0.0
    %390 = vmatpush.msra.mxu0 0.0
    %391 = vmatpush.msra.mxu0 0.0
    %392 = vmatpush.msra.mxu0 %v372
    %393 = vmatmul.f32.gmra.mxu0 %v375
    %v394 = vpop.f32.mrf.mxu0
    %v395 = vadd.f32 0.0, %v394
    %396 = vdwg.mxu0
    %398 = vrot.lane.b32.xlu0 %v239, 8
    %v399 = vpop.permute.xlu0 %398
    %402 = vrot.lane.b32.xlu0 %v317, 16
    %v403 = vpop.permute.xlu0 %402
    %406 = vrot.lane.b32.xlu0 %v395, 24
    %v407 = vpop.permute.xlu0 %406
    %v409 = vsel %vm88, %v161, %v399
    %vm410 = vcmask 130048
    %v411 = vsel %vm410, %v409, %v403
    %vm412 = vcmask 195584
    %v413 = vsel %vm412, %v411, %v407
    %415 = vrot.lane.b32.xlu0 %v83, 120
    %v416 = vpop.permute.xlu0 %415
    %v417 = vsel %vm88, %v83, 0
    %v419 = vsel %vm88, %v416, 0
    %421 = vmatpush.xpose.msra.mxu0 0.0
    %422 = vmatpush.xpose.msra.mxu0 0.0
    %423 = vmatpush.xpose.msra.mxu0 0.0
    %424 = vmatpush.xpose.msra.mxu0 0.0
    %425 = vmatpush.xpose.msra.mxu0 0.0
    %426 = vmatpush.xpose.msra.mxu0 0.0
    %427 = vmatpush.xpose.msra.mxu0 0.0
    %428 = vmatpush.xpose.msra.mxu0 0.0
    %429 = vmatpush.xpose.msra.mxu0 0.0
    %430 = vmatpush.xpose.msra.mxu0 0.0
    %431 = vmatpush.xpose.msra.mxu0 0.0
    %432 = vmatpush.xpose.msra.mxu0 0.0
    %433 = vmatpush.xpose.msra.mxu0 0.0
    %434 = vmatpush.xpose.msra.mxu0 0.0
    %435 = vmatpush.xpose.msra.mxu0 0.0
    %436 = vmatpush.xpose.msra.mxu0 %v419
    %437 = vmatmul.f32.gmra.mxu0 %v417
    %v438 = vpop.f32.mrf.mxu0
    %v439 = vadd.f32 0.0, %v438
    %440 = vdwg.mxu0
    %v441 = vsel %vm88, %v439, -inf
    %442 = vmax.xlane.f32.xlu0 %v441
    %v443 = vpop.xlane.xlu0 %442
    %v444 = vsub.f32 %v439, %v443
    %v445 = vmul.f32 %v444, 1.442695
    %v446 = vpow.pop %v445
    %v447 = vsel %vm88, %v446, 0.0
    %448 = vadd.xlane.f32.xlu0 %v447
    %v449 = vpop.xlane.xlu0 %448
    %v450 = vrcp.pop %v449
    %v451 = vmul.f32 %v449, %v450
    %v452 = vsub.f32 1.0, %v451
    %v453 = vmul.f32 %v450, %v452
    %v454 = vadd.f32 %v450, %v453
    %vm455 = vweird.f32 %v449
    %vm456 = vweird.f32 %v450
    %vm457 = vmor %vm455, %vm456
    %v458 = vsel %vm457, %v450, %v454
    %v459 = vand.u32 2147483647, %v449
    %vm460 = vcmp.eq.f32.partialorder %v459, 8.507059e+37
    %v461 = vand.u32 %v449, 2147483648
    %v462 = vor.u32 1.1754944e-38, %v461
    %v463 = vsel %vm460, %v462, %v458
    %v464 = vmul.f32 %v446, %v463
    %465 = vrot.lane.b32.xlu0 %v83, 112
    %v466 = vpop.permute.xlu0 %465
    %v469 = vsel %vm88, %v464, 0
    %471 = vmatpush.msra.mxu0 0.0
    %472 = vmatpush.msra.mxu0 0.0
    %473 = vmatpush.msra.mxu0 0.0
    %474 = vmatpush.msra.mxu0 0.0
    %475 = vmatpush.msra.mxu0 0.0
    %476 = vmatpush.msra.mxu0 0.0
    %477 = vmatpush.msra.mxu0 0.0
    %478 = vmatpush.msra.mxu0 0.0
    %479 = vmatpush.msra.mxu0 0.0
    %480 = vmatpush.msra.mxu0 0.0
    %481 = vmatpush.msra.mxu0 0.0
    %482 = vmatpush.msra.mxu0 0.0
    %483 = vmatpush.msra.mxu0 0.0
    %484 = vmatpush.msra.mxu0 0.0
    %485 = vmatpush.msra.mxu0 0.0
    %486 = vmatpush.msra.mxu0 %v466
    %487 = vmatmul.f32.gmra.mxu0 %v469
    %v488 = vpop.f32.mrf.mxu0
    %v489 = vadd.f32 0.0, %v488
    %490 = vdwg.mxu0
    %491 = vrot.lane.b32.xlu0 %v83, 104
    %v492 = vpop.permute.xlu0 %491
    %493 = vrot.lane.b32.xlu0 %v83, 96
    %v494 = vpop.permute.xlu0 %493
    %v495 = vsel %vm88, %v492, 0
    %v497 = vsel %vm88, %v494, 0
    %499 = vmatpush.xpose.msra.mxu0 0.0
    %500 = vmatpush.xpose.msra.mxu0 0.0
    %501 = vmatpush.xpose.msra.mxu0 0.0
    %502 = vmatpush.xpose.msra.mxu0 0.0
    %503 = vmatpush.xpose.msra.mxu0 0.0
    %504 = vmatpush.xpose.msra.mxu0 0.0
    %505 = vmatpush.xpose.msra.mxu0 0.0
    %506 = vmatpush.xpose.msra.mxu0 0.0
    %507 = vmatpush.xpose.msra.mxu0 0.0
    %508 = vmatpush.xpose.msra.mxu0 0.0
    %509 = vmatpush.xpose.msra.mxu0 0.0
    %510 = vmatpush.xpose.msra.mxu0 0.0
    %511 = vmatpush.xpose.msra.mxu0 0.0
    %512 = vmatpush.xpose.msra.mxu0 0.0
    %513 = vmatpush.xpose.msra.mxu0 0.0
    %514 = vmatpush.xpose.msra.mxu0 %v497
    %515 = vmatmul.f32.gmra.mxu0 %v495
    %v516 = vpop.f32.mrf.mxu0
    %v517 = vadd.f32 0.0, %v516
    %518 = vdwg.mxu0
    %v519 = vsel %vm88, %v517, -inf
    %520 = vmax.xlane.f32.xlu0 %v519
    %v521 = vpop.xlane.xlu0 %520
    %v522 = vsub.f32 %v517, %v521
    %v523 = vmul.f32 %v522, 1.442695
    %v524 = vpow.pop %v523
    %v525 = vsel %vm88, %v524, 0.0
    %526 = vadd.xlane.f32.xlu0 %v525
    %v527 = vpop.xlane.xlu0 %526
    %v528 = vrcp.pop %v527
    %v529 = vmul.f32 %v527, %v528
    %v530 = vsub.f32 1.0, %v529
    %v531 = vmul.f32 %v528, %v530
    %v532 = vadd.f32 %v528, %v531
    %vm533 = vweird.f32 %v527
    %vm534 = vweird.f32 %v528
    %vm535 = vmor %vm533, %vm534
    %v536 = vsel %vm535, %v528, %v532
    %v537 = vand.u32 2147483647, %v527
    %vm538 = vcmp.eq.f32.partialorder %v537, 8.507059e+37
    %v539 = vand.u32 %v527, 2147483648
    %v540 = vor.u32 1.1754944e-38, %v539
    %v541 = vsel %vm538, %v540, %v536
    %v542 = vmul.f32 %v524, %v541
    %543 = vrot.lane.b32.xlu0 %v83, 88
    %v544 = vpop.permute.xlu0 %543
    %v547 = vsel %vm88, %v542, 0
    %549 = vmatpush.msra.mxu0 0.0
    %550 = vmatpush.msra.mxu0 0.0
    %551 = vmatpush.msra.mxu0 0.0
    %552 = vmatpush.msra.mxu0 0.0
    %553 = vmatpush.msra.mxu0 0.0
    %554 = vmatpush.msra.mxu0 0.0
    %555 = vmatpush.msra.mxu0 0.0
    %556 = vmatpush.msra.mxu0 0.0
    %557 = vmatpush.msra.mxu0 0.0
    %558 = vmatpush.msra.mxu0 0.0
    %559 = vmatpush.msra.mxu0 0.0
    %560 = vmatpush.msra.mxu0 0.0
    %561 = vmatpush.msra.mxu0 0.0
    %562 = vmatpush.msra.mxu0 0.0
    %563 = vmatpush.msra.mxu0 0.0
    %564 = vmatpush.msra.mxu0 %v544
    %565 = vmatmul.f32.gmra.mxu0 %v547
    %v566 = vpop.f32.mrf.mxu0
    %v567 = vadd.f32 0.0, %v566
    %568 = vdwg.mxu0
    %569 = vrot.lane.b32.xlu0 %v83, 80
    %v570 = vpop.permute.xlu0 %569
    %571 = vrot.lane.b32.xlu0 %v83, 72
    %v572 = vpop.permute.xlu0 %571
    %v573 = vsel %vm88, %v570, 0
    %v575 = vsel %vm88, %v572, 0
    %577 = vmatpush.xpose.msra.mxu0 0.0
    %578 = vmatpush.xpose.msra.mxu0 0.0
    %579 = vmatpush.xpose.msra.mxu0 0.0
    %580 = vmatpush.xpose.msra.mxu0 0.0
    %581 = vmatpush.xpose.msra.mxu0 0.0
    %582 = vmatpush.xpose.msra.mxu0 0.0
    %583 = vmatpush.xpose.msra.mxu0 0.0
    %584 = vmatpush.xpose.msra.mxu0 0.0
    %585 = vmatpush.xpose.msra.mxu0 0.0
    %586 = vmatpush.xpose.msra.mxu0 0.0
    %587 = vmatpush.xpose.msra.mxu0 0.0
    %588 = vmatpush.xpose.msra.mxu0 0.0
    %589 = vmatpush.xpose.msra.mxu0 0.0
    %590 = vmatpush.xpose.msra.mxu0 0.0
    %591 = vmatpush.xpose.msra.mxu0 0.0
    %592 = vmatpush.xpose.msra.mxu0 %v575
    %593 = vmatmul.f32.gmra.mxu0 %v573
    %v594 = vpop.f32.mrf.mxu0
    %v595 = vadd.f32 0.0, %v594
    %596 = vdwg.mxu0
    %v597 = vsel %vm88, %v595, -inf
    %598 = vmax.xlane.f32.xlu0 %v597
    %v599 = vpop.xlane.xlu0 %598
    %v600 = vsub.f32 %v595, %v599
    %v601 = vmul.f32 %v600, 1.442695
    %v602 = vpow.pop %v601
    %v603 = vsel %vm88, %v602, 0.0
    %604 = vadd.xlane.f32.xlu0 %v603
    %v605 = vpop.xlane.xlu0 %604
    %v606 = vrcp.pop %v605
    %v607 = vmul.f32 %v605, %v606
    %v608 = vsub.f32 1.0, %v607
    %v609 = vmul.f32 %v606, %v608
    %v610 = vadd.f32 %v606, %v609
    %vm611 = vweird.f32 %v605
    %vm612 = vweird.f32 %v606
    %vm613 = vmor %vm611, %vm612
    %v614 = vsel %vm613, %v606, %v610
    %v615 = vand.u32 2147483647, %v605
    %vm616 = vcmp.eq.f32.partialorder %v615, 8.507059e+37
    %v617 = vand.u32 %v605, 2147483648
    %v618 = vor.u32 1.1754944e-38, %v617
    %v619 = vsel %vm616, %v618, %v614
    %v620 = vmul.f32 %v602, %v619
    %621 = vrot.lane.b32.xlu0 %v83, 64
    %v622 = vpop.permute.xlu0 %621
    %v625 = vsel %vm88, %v620, 0
    %627 = vmatpush.msra.mxu0 0.0
    %628 = vmatpush.msra.mxu0 0.0
    %629 = vmatpush.msra.mxu0 0.0
    %630 = vmatpush.msra.mxu0 0.0
    %631 = vmatpush.msra.mxu0 0.0
    %632 = vmatpush.msra.mxu0 0.0
    %633 = vmatpush.msra.mxu0 0.0
    %634 = vmatpush.msra.mxu0 0.0
    %635 = vmatpush.msra.mxu0 0.0
    %636 = vmatpush.msra.mxu0 0.0
    %637 = vmatpush.msra.mxu0 0.0
    %638 = vmatpush.msra.mxu0 0.0
    %639 = vmatpush.msra.mxu0 0.0
    %640 = vmatpush.msra.mxu0 0.0
    %641 = vmatpush.msra.mxu0 0.0
    %642 = vmatpush.msra.mxu0 %v622
    %643 = vmatmul.f32.gmra.mxu0 %v625
    %v644 = vpop.f32.mrf.mxu0
    %v645 = vadd.f32 0.0, %v644
    %646 = vdwg.mxu0
    %647 = vrot.lane.b32.xlu0 %v83, 56
    %v648 = vpop.permute.xlu0 %647
    %649 = vrot.lane.b32.xlu0 %v83, 48
    %v650 = vpop.permute.xlu0 %649
    %v651 = vsel %vm88, %v648, 0
    %v653 = vsel %vm88, %v650, 0
    %655 = vmatpush.xpose.msra.mxu0 0.0
    %656 = vmatpush.xpose.msra.mxu0 0.0
    %657 = vmatpush.xpose.msra.mxu0 0.0
    %658 = vmatpush.xpose.msra.mxu0 0.0
    %659 = vmatpush.xpose.msra.mxu0 0.0
    %660 = vmatpush.xpose.msra.mxu0 0.0
    %661 = vmatpush.xpose.msra.mxu0 0.0
    %662 = vmatpush.xpose.msra.mxu0 0.0
    %663 = vmatpush.xpose.msra.mxu0 0.0
    %664 = vmatpush.xpose.msra.mxu0 0.0
    %665 = vmatpush.xpose.msra.mxu0 0.0
    %666 = vmatpush.xpose.msra.mxu0 0.0
    %667 = vmatpush.xpose.msra.mxu0 0.0
    %668 = vmatpush.xpose.msra.mxu0 0.0
    %669 = vmatpush.xpose.msra.mxu0 0.0
    %670 = vmatpush.xpose.msra.mxu0 %v653
    %671 = vmatmul.f32.gmra.mxu0 %v651
    %v672 = vpop.f32.mrf.mxu0
    %v673 = vadd.f32 0.0, %v672
    %674 = vdwg.mxu0
    %v675 = vsel %vm88, %v673, -inf
    %676 = vmax.xlane.f32.xlu0 %v675
    %v677 = vpop.xlane.xlu0 %676
    %v678 = vsub.f32 %v673, %v677
    %v679 = vmul.f32 %v678, 1.442695
    %v680 = vpow.pop %v679
    %v681 = vsel %vm88, %v680, 0.0
    %682 = vadd.xlane.f32.xlu0 %v681
    %v683 = vpop.xlane.xlu0 %682
    %v684 = vrcp.pop %v683
    %v685 = vmul.f32 %v683, %v684
    %v686 = vsub.f32 1.0, %v685
    %v687 = vmul.f32 %v684, %v686
    %v688 = vadd.f32 %v684, %v687
    %vm689 = vweird.f32 %v683
    %vm690 = vweird.f32 %v684
    %vm691 = vmor %vm689, %vm690
    %v692 = vsel %vm691, %v684, %v688
    %v693 = vand.u32 2147483647, %v683
    %vm694 = vcmp.eq.f32.partialorder %v693, 8.507059e+37
    %v695 = vand.u32 %v683, 2147483648
    %v696 = vor.u32 1.1754944e-38, %v695
    %v697 = vsel %vm694, %v696, %v692
    %v698 = vmul.f32 %v680, %v697
    %699 = vrot.lane.b32.xlu0 %v83, 40
    %v700 = vpop.permute.xlu0 %699
    %v703 = vsel %vm88, %v698, 0
    %705 = vmatpush.msra.mxu0 0.0
    %706 = vmatpush.msra.mxu0 0.0
    %707 = vmatpush.msra.mxu0 0.0
    %708 = vmatpush.msra.mxu0 0.0
    %709 = vmatpush.msra.mxu0 0.0
    %710 = vmatpush.msra.mxu0 0.0
    %711 = vmatpush.msra.mxu0 0.0
    %712 = vmatpush.msra.mxu0 0.0
    %713 = vmatpush.msra.mxu0 0.0
    %714 = vmatpush.msra.mxu0 0.0
    %715 = vmatpush.msra.mxu0 0.0
    %716 = vmatpush.msra.mxu0 0.0
    %717 = vmatpush.msra.mxu0 0.0
    %718 = vmatpush.msra.mxu0 0.0
    %719 = vmatpush.msra.mxu0 0.0
    %720 = vmatpush.msra.mxu0 %v700
    %721 = vmatmul.f32.gmra.mxu0 %v703
    %v722 = vpop.f32.mrf.mxu0
    %v723 = vadd.f32 0.0, %v722
    %724 = vdwg.mxu0
    %726 = vrot.lane.b32.xlu0 %v567, 8
    %v727 = vpop.permute.xlu0 %726
    %730 = vrot.lane.b32.xlu0 %v645, 16
    %v731 = vpop.permute.xlu0 %730
    %734 = vrot.lane.b32.xlu0 %v723, 24
    %v735 = vpop.permute.xlu0 %734
    %v737 = vsel %vm88, %v489, %v727
    %v738 = vsel %vm410, %v737, %v731
    %v739 = vsel %vm412, %v738, %v735
    %v740 = vperm.slane %v53, 1
    %v742 = vsel %vm55, %v413, 0
    %v745 = vsel %vm55, %v739, 0
    %747 = vmatpush.msra.mxu0 0.0
    %748 = vmatpush.msra.mxu0 0.0
    %749 = vmatpush.msra.mxu0 0.0
    %750 = vmatpush.msra.mxu0 0.0
    %751 = vmatpush.msra.mxu0 0.0
    %752 = vmatpush.msra.mxu0 0.0
    %753 = vmatpush.msra.mxu0 0.0
    %754 = vmatpush.msra.mxu0 0.0
    %755 = vmatpush.msra.mxu0 0.0
    %756 = vmatpush.msra.mxu0 0.0
    %757 = vmatpush.msra.mxu0 0.0
    %758 = vmatpush.msra.mxu0 0.0
    %759 = vmatpush.msra.mxu0 %v40
    %760 = vmatpush.msra.mxu0 %v39
    %761 = vmatpush.msra.mxu0 %v38
    %762 = vmatpush.msra.mxu0 %v37
    %763 = vmatmul.f32.gmra.mxu0 %v742
    %v764 = vpop.f32.mrf.mxu0
    %v765 = vadd.f32 %v740, %v764
    %766 = vmatmul.f32.gmra.mxu0 %v745
    %v767 = vpop.f32.mrf.mxu0
    %v768 = vadd.f32 %v740, %v767
    %769 = vdwg.mxu0
    %v770 = vadd.f32 %v765, %v30
    %v771 = vadd.f32 %v768, %v32
    %v772 = vsel %vm55, %v770, 0.0
    %773 = vadd.xlane.f32.xlu0 %v772
    %v774 = vpop.xlane.xlu0 %773
    %v775 = vsel %vm55, %v771, 0.0
    %776 = vadd.xlane.f32.xlu0 %v775
    %v777 = vpop.xlane.xlu0 %776
    %v778 = vrcp.pop 32.0
    %v779 = vmul.f32 32.0, %v778
    %v780 = vsub.f32 1.0, %v779
    %v781 = vmul.f32 %v778, %v780
    %v782 = vadd.f32 %v778, %v781
    %vm783 = vweird.f32 %v778
    %v784 = vsel %vm783, %v778, %v782
    %v785 = vmul.f32 %v774, %v784
    %v786 = vmul.f32 %v777, %v784
    %v787 = vsub.f32 %v770, %v785
    %v788 = vsub.f32 %v771, %v786
    %v789 = vmul.f32 %v787, %v787
    %v790 = vmul.f32 %v788, %v788
    %v791 = vsel %vm55, %v789, 0.0
    %792 = vadd.xlane.f32.xlu0 %v791
    %v793 = vpop.xlane.xlu0 %792
    %v794 = vsel %vm55, %v790, 0.0
    %795 = vadd.xlane.f32.xlu0 %v794
    %v796 = vpop.xlane.xlu0 %795
    %v797 = vmul.f32 %v793, %v784
    %v798 = vmul.f32 %v796, %v784
    %v799 = vadd.f32 %v797, 1e-12
    %v800 = vadd.f32 %v798, 1e-12
    %v801 = vrsqrt.pop %v799
    %v802 = vmul.f32 %v801, %v799
    %v803 = vmul.f32 %v802, %v801
    %v804 = vmul.f32 0.5, %v803
    %v805 = vsub.f32 1.5, %v804
    %v806 = vmul.f32 %v801, %v805
    %vm807 = vweird.f32 %v799
    %vm808 = vweird.f32 %v801
    %vm809 = vmor %vm807, %vm808
    %v810 = vsel %vm809, %v801, %v806
    %v811 = vrsqrt.pop %v800
    %v812 = vmul.f32 %v811, %v800
    %v813 = vmul.f32 %v812, %v811
    %v814 = vmul.f32 0.5, %v813
    %v815 = vsub.f32 1.5, %v814
    %v816 = vmul.f32 %v811, %v815
    %vm817 = vweird.f32 %v800
    %vm818 = vweird.f32 %v811
    %vm819 = vmor %vm817, %vm818
    %v820 = vsel %vm819, %v811, %v816
    %v821 = vmul.f32 %v787, %v810
    %v822 = vmul.f32 %v788, %v820
    %v823 = vperm.slane %v53, 2
    %v824 = vmul.f32 %v821, %v823
    %v825 = vmul.f32 %v822, %v823
    %v826 = vperm.slane %v53, 3
    %v827 = vadd.f32 %v824, %v826
    %v828 = vadd.f32 %v825, %v826
    %v829 = vperm.slane %v53, 4
    %v831 = vsel %vm55, %v827, 0
    %v834 = vsel %vm55, %v828, 0
    %836 = vmatpush.msra.mxu0 0.0
    %837 = vmatpush.msra.mxu0 0.0
    %838 = vmatpush.msra.mxu0 0.0
    %839 = vmatpush.msra.mxu0 0.0
    %840 = vmatpush.msra.mxu0 0.0
    %841 = vmatpush.msra.mxu0 0.0
    %842 = vmatpush.msra.mxu0 0.0
    %843 = vmatpush.msra.mxu0 0.0
    %844 = vmatpush.msra.mxu0 0.0
    %845 = vmatpush.msra.mxu0 0.0
    %846 = vmatpush.msra.mxu0 0.0
    %847 = vmatpush.msra.mxu0 0.0
    %848 = vmatpush.msra.mxu0 %v44
    %849 = vmatpush.msra.mxu0 %v43
    %850 = vmatpush.msra.mxu0 %v42
    %851 = vmatpush.msra.mxu0 %v41
    %852 = vmatmul.f32.gmra.mxu0 %v831
    %v853 = vpop.f32.mrf.mxu0
    %v854 = vadd.f32 %v829, %v853
    %855 = vmatmul.f32.gmra.mxu0 %v834
    %v856 = vpop.f32.mrf.mxu0
    %v857 = vadd.f32 %v829, %v856
    %858 = vdwg.mxu0
    %v859 = vmax.f32 %v854, 0.0
    %v860 = vmax.f32 %v857, 0.0
    %v861 = vperm.slane %v53, 5
    %vm862 = vcmask 523264
    %v864 = vsel %vm862, %v859, 0
    %v867 = vsel %vm862, %v860, 0
    %869 = vmatpush.msra.mxu0 0.0
    %870 = vmatpush.msra.mxu0 0.0
    %871 = vmatpush.msra.mxu0 0.0
    %872 = vmatpush.msra.mxu0 0.0
    %873 = vmatpush.msra.mxu0 0.0
    %874 = vmatpush.msra.mxu0 0.0
    %875 = vmatpush.msra.mxu0 0.0
    %876 = vmatpush.msra.mxu0 0.0
    %877 = vmatpush.msra.mxu0 %v52
    %878 = vmatpush.msra.mxu0 %v51
    %879 = vmatpush.msra.mxu0 %v50
    %880 = vmatpush.msra.mxu0 %v49
    %881 = vmatpush.msra.mxu0 %v48
    %882 = vmatpush.msra.mxu0 %v47
    %883 = vmatpush.msra.mxu0 %v46
    %884 = vmatpush.msra.mxu0 %v45
    %885 = vmatmul.f32.gmra.mxu0 %v864
    %v886 = vpop.f32.mrf.mxu0
    %v887 = vadd.f32 %v861, %v886
    %888 = vmatmul.f32.gmra.mxu0 %v867
    %v889 = vpop.f32.mrf.mxu0
    %v890 = vadd.f32 %v861, %v889
    %891 = vdwg.mxu0
    %v892 = vadd.f32 %v887, %v827
    %v893 = vadd.f32 %v890, %v828
    %v894 = vsel %vm55, %v892, 0.0
    %895 = vadd.xlane.f32.xlu0 %v894
    %v896 = vpop.xlane.xlu0 %895
    %v897 = vsel %vm55, %v893, 0.0
    %898 = vadd.xlane.f32.xlu0 %v897
    %v899 = vpop.xlane.xlu0 %898
    %v900 = vmul.f32 %v896, %v784
    %v901 = vmul.f32 %v899, %v784
    %v902 = vsub.f32 %v892, %v900
    %v903 = vsub.f32 %v893, %v901
    %v904 = vmul.f32 %v902, %v902
    %v905 = vmul.f32 %v903, %v903
    %v906 = vsel %vm55, %v904, 0.0
    %907 = vadd.xlane.f32.xlu0 %v906
    %v908 = vpop.xlane.xlu0 %907
    %v909 = vsel %vm55, %v905, 0.0
    %910 = vadd.xlane.f32.xlu0 %v909
    %v911 = vpop.xlane.xlu0 %910
    %v912 = vmul.f32 %v908, %v784
    %v913 = vmul.f32 %v911, %v784
    %v914 = vadd.f32 %v912, 1e-12
    %v915 = vadd.f32 %v913, 1e-12
    %v916 = vrsqrt.pop %v914
    %v917 = vmul.f32 %v916, %v914
    %v918 = vmul.f32 %v917, %v916
    %v919 = vmul.f32 0.5, %v918
    %v920 = vsub.f32 1.5, %v919
    %v921 = vmul.f32 %v916, %v920
    %vm922 = vweird.f32 %v914
    %vm923 = vweird.f32 %v916
    %vm924 = vmor %vm922, %vm923
    %v925 = vsel %vm924, %v916, %v921
    %v926 = vrsqrt.pop %v915
    %v927 = vmul.f32 %v926, %v915
    %v928 = vmul.f32 %v927, %v926
    %v929 = vmul.f32 0.5, %v928
    %v930 = vsub.f32 1.5, %v929
    %v931 = vmul.f32 %v926, %v930
    %vm932 = vweird.f32 %v915
    %vm933 = vweird.f32 %v926
    %vm934 = vmor %vm932, %vm933
    %v935 = vsel %vm934, %v926, %v931
    %v936 = vmul.f32 %v902, %v925
    %v937 = vmul.f32 %v903, %v935
    %v938 = vperm.slane %v53, 6
    %v939 = vmul.f32 %v936, %v938
    %v940 = vmul.f32 %v937, %v938
    %v941 = vperm.slane %v53, 7
    %v942 = vadd.f32 %v939, %v941
    %v943 = vadd.f32 %v940, %v941
    %s944 = scalar_lea.vmem %s1, 32
    %v945 = vld [vmem:[%s944] sm:$0xff]
    %v946 = vld [vmem:[%s944 + $0x8] sm:$0xff]
    %v947 = vld [vmem:[%s944 + $0x10] sm:$0xff]
    %v948 = vld [vmem:[%s944 + $0x18] sm:$0xff]
    %s949 = scalar_lea.vmem %s2, 32
    %v950 = vld [vmem:[%s949] sm:$0xff]
    %v951 = vld [vmem:[%s949 + $0x8] sm:$0xff]
    %v952 = vld [vmem:[%s949 + $0x10] sm:$0xff]
    %v953 = vld [vmem:[%s949 + $0x18] sm:$0xff]
    %s954 = scalar_lea.vmem %s3, 32
    %v955 = vld [vmem:[%s954] sm:$0xff]
    %v956 = vld [vmem:[%s954 + $0x8] sm:$0xff]
    %v957 = vld [vmem:[%s954 + $0x10] sm:$0xff]
    %v958 = vld [vmem:[%s954 + $0x18] sm:$0xff]
    %s959 = scalar_lea.vmem %s4, 64
    %v960 = vld [vmem:[%s959] sm:$0xff]
    %v961 = vld [vmem:[%s959 + $0x8] sm:$0xff]
    %v962 = vld [vmem:[%s959 + $0x10] sm:$0xff]
    %v963 = vld [vmem:[%s959 + $0x18] sm:$0xff]
    %v964 = vld [vmem:[%s959 + $0x20] sm:$0xff]
    %v965 = vld [vmem:[%s959 + $0x28] sm:$0xff]
    %v966 = vld [vmem:[%s959 + $0x30] sm:$0xff]
    %v967 = vld [vmem:[%s959 + $0x38] sm:$0xff]
    %s968 = scalar_lea.vmem %s5, 8
    %v969 = vld [vmem:[%s968] sm:$0xff]
    %v970 = vperm.slane %v969, 0
    %v972 = vsel %vm55, %v942, 0
    %v975 = vsel %vm55, %v943, 0
    %977 = vmatpush.msra.mxu0 0.0
    %978 = vmatpush.msra.mxu0 0.0
    %979 = vmatpush.msra.mxu0 0.0
    %980 = vmatpush.msra.mxu0 0.0
    %981 = vmatpush.msra.mxu0 0.0
    %982 = vmatpush.msra.mxu0 0.0
    %983 = vmatpush.msra.mxu0 0.0
    %984 = vmatpush.msra.mxu0 0.0
    %985 = vmatpush.msra.mxu0 0.0
    %986 = vmatpush.msra.mxu0 0.0
    %987 = vmatpush.msra.mxu0 0.0
    %988 = vmatpush.msra.mxu0 0.0
    %989 = vmatpush.msra.mxu0 %v948
    %990 = vmatpush.msra.mxu0 %v947
    %991 = vmatpush.msra.mxu0 %v946
    %992 = vmatpush.msra.mxu0 %v945
    %993 = vmatmul.f32.gmra.mxu0 %v972
    %v994 = vpop.f32.mrf.mxu0
    %v995 = vadd.f32 %v970, %v994
    %996 = vmatmul.f32.gmra.mxu0 %v975
    %v997 = vpop.f32.mrf.mxu0
    %v998 = vadd.f32 %v970, %v997
    %999 = vdwg.mxu0
    %1001 = vrot.lane.b32.xlu0 %v995, 120
    %v1002 = vpop.permute.xlu0 %1001
    %v1003 = vsel %vm88, %v995, 0
    %v1005 = vsel %vm88, %v1002, 0
    %1007 = vmatpush.xpose.msra.mxu0 0.0
    %1008 = vmatpush.xpose.msra.mxu0 0.0
    %1009 = vmatpush.xpose.msra.mxu0 0.0
    %1010 = vmatpush.xpose.msra.mxu0 0.0
    %1011 = vmatpush.xpose.msra.mxu0 0.0
    %1012 = vmatpush.xpose.msra.mxu0 0.0
    %1013 = vmatpush.xpose.msra.mxu0 0.0
    %1014 = vmatpush.xpose.msra.mxu0 0.0
    %1015 = vmatpush.xpose.msra.mxu0 0.0
    %1016 = vmatpush.xpose.msra.mxu0 0.0
    %1017 = vmatpush.xpose.msra.mxu0 0.0
    %1018 = vmatpush.xpose.msra.mxu0 0.0
    %1019 = vmatpush.xpose.msra.mxu0 0.0
    %1020 = vmatpush.xpose.msra.mxu0 0.0
    %1021 = vmatpush.xpose.msra.mxu0 0.0
    %1022 = vmatpush.xpose.msra.mxu0 %v1005
    %1023 = vmatmul.f32.gmra.mxu0 %v1003
    %v1024 = vpop.f32.mrf.mxu0
    %v1025 = vadd.f32 0.0, %v1024
    %1026 = vdwg.mxu0
    %v1027 = vsel %vm88, %v1025, -inf
    %1028 = vmax.xlane.f32.xlu0 %v1027
    %v1029 = vpop.xlane.xlu0 %1028
    %v1030 = vsub.f32 %v1025, %v1029
    %v1031 = vmul.f32 %v1030, 1.442695
    %v1032 = vpow.pop %v1031
    %v1033 = vsel %vm88, %v1032, 0.0
    %1034 = vadd.xlane.f32.xlu0 %v1033
    %v1035 = vpop.xlane.xlu0 %1034
    %v1036 = vrcp.pop %v1035
    %v1037 = vmul.f32 %v1035, %v1036
    %v1038 = vsub.f32 1.0, %v1037
    %v1039 = vmul.f32 %v1036, %v1038
    %v1040 = vadd.f32 %v1036, %v1039
    %vm1041 = vweird.f32 %v1035
    %vm1042 = vweird.f32 %v1036
    %vm1043 = vmor %vm1041, %vm1042
    %v1044 = vsel %vm1043, %v1036, %v1040
    %v1045 = vand.u32 2147483647, %v1035
    %vm1046 = vcmp.eq.f32.partialorder %v1045, 8.507059e+37
    %v1047 = vand.u32 %v1035, 2147483648
    %v1048 = vor.u32 1.1754944e-38, %v1047
    %v1049 = vsel %vm1046, %v1048, %v1044
    %v1050 = vmul.f32 %v1032, %v1049
    %1051 = vrot.lane.b32.xlu0 %v995, 112
    %v1052 = vpop.permute.xlu0 %1051
    %v1055 = vsel %vm88, %v1050, 0
    %1057 = vmatpush.msra.mxu0 0.0
    %1058 = vmatpush.msra.mxu0 0.0
    %1059 = vmatpush.msra.mxu0 0.0
    %1060 = vmatpush.msra.mxu0 0.0
    %1061 = vmatpush.msra.mxu0 0.0
    %1062 = vmatpush.msra.mxu0 0.0
    %1063 = vmatpush.msra.mxu0 0.0
    %1064 = vmatpush.msra.mxu0 0.0
    %1065 = vmatpush.msra.mxu0 0.0
    %1066 = vmatpush.msra.mxu0 0.0
    %1067 = vmatpush.msra.mxu0 0.0
    %1068 = vmatpush.msra.mxu0 0.0
    %1069 = vmatpush.msra.mxu0 0.0
    %1070 = vmatpush.msra.mxu0 0.0
    %1071 = vmatpush.msra.mxu0 0.0
    %1072 = vmatpush.msra.mxu0 %v1052
    %1073 = vmatmul.f32.gmra.mxu0 %v1055
    %v1074 = vpop.f32.mrf.mxu0
    %v1075 = vadd.f32 0.0, %v1074
    %1076 = vdwg.mxu0
    %1077 = vrot.lane.b32.xlu0 %v995, 104
    %v1078 = vpop.permute.xlu0 %1077
    %1079 = vrot.lane.b32.xlu0 %v995, 96
    %v1080 = vpop.permute.xlu0 %1079
    %v1081 = vsel %vm88, %v1078, 0
    %v1083 = vsel %vm88, %v1080, 0
    %1085 = vmatpush.xpose.msra.mxu0 0.0
    %1086 = vmatpush.xpose.msra.mxu0 0.0
    %1087 = vmatpush.xpose.msra.mxu0 0.0
    %1088 = vmatpush.xpose.msra.mxu0 0.0
    %1089 = vmatpush.xpose.msra.mxu0 0.0
    %1090 = vmatpush.xpose.msra.mxu0 0.0
    %1091 = vmatpush.xpose.msra.mxu0 0.0
    %1092 = vmatpush.xpose.msra.mxu0 0.0
    %1093 = vmatpush.xpose.msra.mxu0 0.0
    %1094 = vmatpush.xpose.msra.mxu0 0.0
    %1095 = vmatpush.xpose.msra.mxu0 0.0
    %1096 = vmatpush.xpose.msra.mxu0 0.0
    %1097 = vmatpush.xpose.msra.mxu0 0.0
    %1098 = vmatpush.xpose.msra.mxu0 0.0
    %1099 = vmatpush.xpose.msra.mxu0 0.0
    %1100 = vmatpush.xpose.msra.mxu0 %v1083
    %1101 = vmatmul.f32.gmra.mxu0 %v1081
    %v1102 = vpop.f32.mrf.mxu0
    %v1103 = vadd.f32 0.0, %v1102
    %1104 = vdwg.mxu0
    %v1105 = vsel %vm88, %v1103, -inf
    %1106 = vmax.xlane.f32.xlu0 %v1105
    %v1107 = vpop.xlane.xlu0 %1106
    %v1108 = vsub.f32 %v1103, %v1107
    %v1109 = vmul.f32 %v1108, 1.442695
    %v1110 = vpow.pop %v1109
    %v1111 = vsel %vm88, %v1110, 0.0
    %1112 = vadd.xlane.f32.xlu0 %v1111
    %v1113 = vpop.xlane.xlu0 %1112
    %v1114 = vrcp.pop %v1113
    %v1115 = vmul.f32 %v1113, %v1114
    %v1116 = vsub.f32 1.0, %v1115
    %v1117 = vmul.f32 %v1114, %v1116
    %v1118 = vadd.f32 %v1114, %v1117
    %vm1119 = vweird.f32 %v1113
    %vm1120 = vweird.f32 %v1114
    %vm1121 = vmor %vm1119, %vm1120
    %v1122 = vsel %vm1121, %v1114, %v1118
    %v1123 = vand.u32 2147483647, %v1113
    %vm1124 = vcmp.eq.f32.partialorder %v1123, 8.507059e+37
    %v1125 = vand.u32 %v1113, 2147483648
    %v1126 = vor.u32 1.1754944e-38, %v1125
    %v1127 = vsel %vm1124, %v1126, %v1122
    %v1128 = vmul.f32 %v1110, %v1127
    %1129 = vrot.lane.b32.xlu0 %v995, 88
    %v1130 = vpop.permute.xlu0 %1129
    %v1133 = vsel %vm88, %v1128, 0
    %1135 = vmatpush.msra.mxu0 0.0
    %1136 = vmatpush.msra.mxu0 0.0
    %1137 = vmatpush.msra.mxu0 0.0
    %1138 = vmatpush.msra.mxu0 0.0
    %1139 = vmatpush.msra.mxu0 0.0
    %1140 = vmatpush.msra.mxu0 0.0
    %1141 = vmatpush.msra.mxu0 0.0
    %1142 = vmatpush.msra.mxu0 0.0
    %1143 = vmatpush.msra.mxu0 0.0
    %1144 = vmatpush.msra.mxu0 0.0
    %1145 = vmatpush.msra.mxu0 0.0
    %1146 = vmatpush.msra.mxu0 0.0
    %1147 = vmatpush.msra.mxu0 0.0
    %1148 = vmatpush.msra.mxu0 0.0
    %1149 = vmatpush.msra.mxu0 0.0
    %1150 = vmatpush.msra.mxu0 %v1130
    %1151 = vmatmul.f32.gmra.mxu0 %v1133
    %v1152 = vpop.f32.mrf.mxu0
    %v1153 = vadd.f32 0.0, %v1152
    %1154 = vdwg.mxu0
    %1155 = vrot.lane.b32.xlu0 %v995, 80
    %v1156 = vpop.permute.xlu0 %1155
    %1157 = vrot.lane.b32.xlu0 %v995, 72
    %v1158 = vpop.permute.xlu0 %1157
    %v1159 = vsel %vm88, %v1156, 0
    %v1161 = vsel %vm88, %v1158, 0
    %1163 = vmatpush.xpose.msra.mxu0 0.0
    %1164 = vmatpush.xpose.msra.mxu0 0.0
    %1165 = vmatpush.xpose.msra.mxu0 0.0
    %1166 = vmatpush.xpose.msra.mxu0 0.0
    %1167 = vmatpush.xpose.msra.mxu0 0.0
    %1168 = vmatpush.xpose.msra.mxu0 0.0
    %1169 = vmatpush.xpose.msra.mxu0 0.0
    %1170 = vmatpush.xpose.msra.mxu0 0.0
    %1171 = vmatpush.xpose.msra.mxu0 0.0
    %1172 = vmatpush.xpose.msra.mxu0 0.0
    %1173 = vmatpush.xpose.msra.mxu0 0.0
    %1174 = vmatpush.xpose.msra.mxu0 0.0
    %1175 = vmatpush.xpose.msra.mxu0 0.0
    %1176 = vmatpush.xpose.msra.mxu0 0.0
    %1177 = vmatpush.xpose.msra.mxu0 0.0
    %1178 = vmatpush.xpose.msra.mxu0 %v1161
    %1179 = vmatmul.f32.gmra.mxu0 %v1159
    %v1180 = vpop.f32.mrf.mxu0
    %v1181 = vadd.f32 0.0, %v1180
    %1182 = vdwg.mxu0
    %v1183 = vsel %vm88, %v1181, -inf
    %1184 = vmax.xlane.f32.xlu0 %v1183
    %v1185 = vpop.xlane.xlu0 %1184
    %v1186 = vsub.f32 %v1181, %v1185
    %v1187 = vmul.f32 %v1186, 1.442695
    %v1188 = vpow.pop %v1187
    %v1189 = vsel %vm88, %v1188, 0.0
    %1190 = vadd.xlane.f32.xlu0 %v1189
    %v1191 = vpop.xlane.xlu0 %1190
    %v1192 = vrcp.pop %v1191
    %v1193 = vmul.f32 %v1191, %v1192
    %v1194 = vsub.f32 1.0, %v1193
    %v1195 = vmul.f32 %v1192, %v1194
    %v1196 = vadd.f32 %v1192, %v1195
    %vm1197 = vweird.f32 %v1191
    %vm1198 = vweird.f32 %v1192
    %vm1199 = vmor %vm1197, %vm1198
    %v1200 = vsel %vm1199, %v1192, %v1196
    %v1201 = vand.u32 2147483647, %v1191
    %vm1202 = vcmp.eq.f32.partialorder %v1201, 8.507059e+37
    %v1203 = vand.u32 %v1191, 2147483648
    %v1204 = vor.u32 1.1754944e-38, %v1203
    %v1205 = vsel %vm1202, %v1204, %v1200
    %v1206 = vmul.f32 %v1188, %v1205
    %1207 = vrot.lane.b32.xlu0 %v995, 64
    %v1208 = vpop.permute.xlu0 %1207
    %v1211 = vsel %vm88, %v1206, 0
    %1213 = vmatpush.msra.mxu0 0.0
    %1214 = vmatpush.msra.mxu0 0.0
    %1215 = vmatpush.msra.mxu0 0.0
    %1216 = vmatpush.msra.mxu0 0.0
    %1217 = vmatpush.msra.mxu0 0.0
    %1218 = vmatpush.msra.mxu0 0.0
    %1219 = vmatpush.msra.mxu0 0.0
    %1220 = vmatpush.msra.mxu0 0.0
    %1221 = vmatpush.msra.mxu0 0.0
    %1222 = vmatpush.msra.mxu0 0.0
    %1223 = vmatpush.msra.mxu0 0.0
    %1224 = vmatpush.msra.mxu0 0.0
    %1225 = vmatpush.msra.mxu0 0.0
    %1226 = vmatpush.msra.mxu0 0.0
    %1227 = vmatpush.msra.mxu0 0.0
    %1228 = vmatpush.msra.mxu0 %v1208
    %1229 = vmatmul.f32.gmra.mxu0 %v1211
    %v1230 = vpop.f32.mrf.mxu0
    %v1231 = vadd.f32 0.0, %v1230
    %1232 = vdwg.mxu0
    %1233 = vrot.lane.b32.xlu0 %v995, 56
    %v1234 = vpop.permute.xlu0 %1233
    %1235 = vrot.lane.b32.xlu0 %v995, 48
    %v1236 = vpop.permute.xlu0 %1235
    %v1237 = vsel %vm88, %v1234, 0
    %v1239 = vsel %vm88, %v1236, 0
    %1241 = vmatpush.xpose.msra.mxu0 0.0
    %1242 = vmatpush.xpose.msra.mxu0 0.0
    %1243 = vmatpush.xpose.msra.mxu0 0.0
    %1244 = vmatpush.xpose.msra.mxu0 0.0
    %1245 = vmatpush.xpose.msra.mxu0 0.0
    %1246 = vmatpush.xpose.msra.mxu0 0.0
    %1247 = vmatpush.xpose.msra.mxu0 0.0
    %1248 = vmatpush.xpose.msra.mxu0 0.0
    %1249 = vmatpush.xpose.msra.mxu0 0.0
    %1250 = vmatpush.xpose.msra.mxu0 0.0
    %1251 = vmatpush.xpose.msra.mxu0 0.0
    %1252 = vmatpush.xpose.msra.mxu0 0.0
    %1253 = vmatpush.xpose.msra.mxu0 0.0
    %1254 = vmatpush.xpose.msra.mxu0 0.0
    %1255 = vmatpush.xpose.msra.mxu0 0.0
    %1256 = vmatpush.xpose.msra.mxu0 %v1239
    %1257 = vmatmul.f32.gmra.mxu0 %v1237
    %v1258 = vpop.f32.mrf.mxu0
    %v1259 = vadd.f32 0.0, %v1258
    %1260 = vdwg.mxu0
    %v1261 = vsel %vm88, %v1259, -inf
    %1262 = vmax.xlane.f32.xlu0 %v1261
    %v1263 = vpop.xlane.xlu0 %1262
    %v1264 = vsub.f32 %v1259, %v1263
    %v1265 = vmul.f32 %v1264, 1.442695
    %v1266 = vpow.pop %v1265
    %v1267 = vsel %vm88, %v1266, 0.0
    %1268 = vadd.xlane.f32.xlu0 %v1267
    %v1269 = vpop.xlane.xlu0 %1268
    %v1270 = vrcp.pop %v1269
    %v1271 = vmul.f32 %v1269, %v1270
    %v1272 = vsub.f32 1.0, %v1271
    %v1273 = vmul.f32 %v1270, %v1272
    %v1274 = vadd.f32 %v1270, %v1273
    %vm1275 = vweird.f32 %v1269
    %vm1276 = vweird.f32 %v1270
    %vm1277 = vmor %vm1275, %vm1276
    %v1278 = vsel %vm1277, %v1270, %v1274
    %v1279 = vand.u32 2147483647, %v1269
    %vm1280 = vcmp.eq.f32.partialorder %v1279, 8.507059e+37
    %v1281 = vand.u32 %v1269, 2147483648
    %v1282 = vor.u32 1.1754944e-38, %v1281
    %v1283 = vsel %vm1280, %v1282, %v1278
    %v1284 = vmul.f32 %v1266, %v1283
    %1285 = vrot.lane.b32.xlu0 %v995, 40
    %v1286 = vpop.permute.xlu0 %1285
    %v1289 = vsel %vm88, %v1284, 0
    %1291 = vmatpush.msra.mxu0 0.0
    %1292 = vmatpush.msra.mxu0 0.0
    %1293 = vmatpush.msra.mxu0 0.0
    %1294 = vmatpush.msra.mxu0 0.0
    %1295 = vmatpush.msra.mxu0 0.0
    %1296 = vmatpush.msra.mxu0 0.0
    %1297 = vmatpush.msra.mxu0 0.0
    %1298 = vmatpush.msra.mxu0 0.0
    %1299 = vmatpush.msra.mxu0 0.0
    %1300 = vmatpush.msra.mxu0 0.0
    %1301 = vmatpush.msra.mxu0 0.0
    %1302 = vmatpush.msra.mxu0 0.0
    %1303 = vmatpush.msra.mxu0 0.0
    %1304 = vmatpush.msra.mxu0 0.0
    %1305 = vmatpush.msra.mxu0 0.0
    %1306 = vmatpush.msra.mxu0 %v1286
    %1307 = vmatmul.f32.gmra.mxu0 %v1289
    %v1308 = vpop.f32.mrf.mxu0
    %v1309 = vadd.f32 0.0, %v1308
    %1310 = vdwg.mxu0
    %1312 = vrot.lane.b32.xlu0 %v1153, 8
    %v1313 = vpop.permute.xlu0 %1312
    %1316 = vrot.lane.b32.xlu0 %v1231, 16
    %v1317 = vpop.permute.xlu0 %1316
    %1320 = vrot.lane.b32.xlu0 %v1309, 24
    %v1321 = vpop.permute.xlu0 %1320
    %v1323 = vsel %vm88, %v1075, %v1313
    %v1324 = vsel %vm410, %v1323, %v1317
    %v1325 = vsel %vm412, %v1324, %v1321
    %1327 = vrot.lane.b32.xlu0 %v998, 120
    %v1328 = vpop.permute.xlu0 %1327
    %v1329 = vsel %vm88, %v998, 0
    %v1331 = vsel %vm88, %v1328, 0
    %1333 = vmatpush.xpose.msra.mxu0 0.0
    %1334 = vmatpush.xpose.msra.mxu0 0.0
    %1335 = vmatpush.xpose.msra.mxu0 0.0
    %1336 = vmatpush.xpose.msra.mxu0 0.0
    %1337 = vmatpush.xpose.msra.mxu0 0.0
    %1338 = vmatpush.xpose.msra.mxu0 0.0
    %1339 = vmatpush.xpose.msra.mxu0 0.0
    %1340 = vmatpush.xpose.msra.mxu0 0.0
    %1341 = vmatpush.xpose.msra.mxu0 0.0
    %1342 = vmatpush.xpose.msra.mxu0 0.0
    %1343 = vmatpush.xpose.msra.mxu0 0.0
    %1344 = vmatpush.xpose.msra.mxu0 0.0
    %1345 = vmatpush.xpose.msra.mxu0 0.0
    %1346 = vmatpush.xpose.msra.mxu0 0.0
    %1347 = vmatpush.xpose.msra.mxu0 0.0
    %1348 = vmatpush.xpose.msra.mxu0 %v1331
    %1349 = vmatmul.f32.gmra.mxu0 %v1329
    %v1350 = vpop.f32.mrf.mxu0
    %v1351 = vadd.f32 0.0, %v1350
    %1352 = vdwg.mxu0
    %v1353 = vsel %vm88, %v1351, -inf
    %1354 = vmax.xlane.f32.xlu0 %v1353
    %v1355 = vpop.xlane.xlu0 %1354
    %v1356 = vsub.f32 %v1351, %v1355
    %v1357 = vmul.f32 %v1356, 1.442695
    %v1358 = vpow.pop %v1357
    %v1359 = vsel %vm88, %v1358, 0.0
    %1360 = vadd.xlane.f32.xlu0 %v1359
    %v1361 = vpop.xlane.xlu0 %1360
    %v1362 = vrcp.pop %v1361
    %v1363 = vmul.f32 %v1361, %v1362
    %v1364 = vsub.f32 1.0, %v1363
    %v1365 = vmul.f32 %v1362, %v1364
    %v1366 = vadd.f32 %v1362, %v1365
    %vm1367 = vweird.f32 %v1361
    %vm1368 = vweird.f32 %v1362
    %vm1369 = vmor %vm1367, %vm1368
    %v1370 = vsel %vm1369, %v1362, %v1366
    %v1371 = vand.u32 2147483647, %v1361
    %vm1372 = vcmp.eq.f32.partialorder %v1371, 8.507059e+37
    %v1373 = vand.u32 %v1361, 2147483648
    %v1374 = vor.u32 1.1754944e-38, %v1373
    %v1375 = vsel %vm1372, %v1374, %v1370
    %v1376 = vmul.f32 %v1358, %v1375
    %1377 = vrot.lane.b32.xlu0 %v998, 112
    %v1378 = vpop.permute.xlu0 %1377
    %v1381 = vsel %vm88, %v1376, 0
    %1383 = vmatpush.msra.mxu0 0.0
    %1384 = vmatpush.msra.mxu0 0.0
    %1385 = vmatpush.msra.mxu0 0.0
    %1386 = vmatpush.msra.mxu0 0.0
    %1387 = vmatpush.msra.mxu0 0.0
    %1388 = vmatpush.msra.mxu0 0.0
    %1389 = vmatpush.msra.mxu0 0.0
    %1390 = vmatpush.msra.mxu0 0.0
    %1391 = vmatpush.msra.mxu0 0.0
    %1392 = vmatpush.msra.mxu0 0.0
    %1393 = vmatpush.msra.mxu0 0.0
    %1394 = vmatpush.msra.mxu0 0.0
    %1395 = vmatpush.msra.mxu0 0.0
    %1396 = vmatpush.msra.mxu0 0.0
    %1397 = vmatpush.msra.mxu0 0.0
    %1398 = vmatpush.msra.mxu0 %v1378
    %1399 = vmatmul.f32.gmra.mxu0 %v1381
    %v1400 = vpop.f32.mrf.mxu0
    %v1401 = vadd.f32 0.0, %v1400
    %1402 = vdwg.mxu0
    %1403 = vrot.lane.b32.xlu0 %v998, 104
    %v1404 = vpop.permute.xlu0 %1403
    %1405 = vrot.lane.b32.xlu0 %v998, 96
    %v1406 = vpop.permute.xlu0 %1405
    %v1407 = vsel %vm88, %v1404, 0
    %v1409 = vsel %vm88, %v1406, 0
    %1411 = vmatpush.xpose.msra.mxu0 0.0
    %1412 = vmatpush.xpose.msra.mxu0 0.0
    %1413 = vmatpush.xpose.msra.mxu0 0.0
    %1414 = vmatpush.xpose.msra.mxu0 0.0
    %1415 = vmatpush.xpose.msra.mxu0 0.0
    %1416 = vmatpush.xpose.msra.mxu0 0.0
    %1417 = vmatpush.xpose.msra.mxu0 0.0
    %1418 = vmatpush.xpose.msra.mxu0 0.0
    %1419 = vmatpush.xpose.msra.mxu0 0.0
    %1420 = vmatpush.xpose.msra.mxu0 0.0
    %1421 = vmatpush.xpose.msra.mxu0 0.0
    %1422 = vmatpush.xpose.msra.mxu0 0.0
    %1423 = vmatpush.xpose.msra.mxu0 0.0
    %1424 = vmatpush.xpose.msra.mxu0 0.0
    %1425 = vmatpush.xpose.msra.mxu0 0.0
    %1426 = vmatpush.xpose.msra.mxu0 %v1409
    %1427 = vmatmul.f32.gmra.mxu0 %v1407
    %v1428 = vpop.f32.mrf.mxu0
    %v1429 = vadd.f32 0.0, %v1428
    %1430 = vdwg.mxu0
    %v1431 = vsel %vm88, %v1429, -inf
    %1432 = vmax.xlane.f32.xlu0 %v1431
    %v1433 = vpop.xlane.xlu0 %1432
    %v1434 = vsub.f32 %v1429, %v1433
    %v1435 = vmul.f32 %v1434, 1.442695
    %v1436 = vpow.pop %v1435
    %v1437 = vsel %vm88, %v1436, 0.0
    %1438 = vadd.xlane.f32.xlu0 %v1437
    %v1439 = vpop.xlane.xlu0 %1438
    %v1440 = vrcp.pop %v1439
    %v1441 = vmul.f32 %v1439, %v1440
    %v1442 = vsub.f32 1.0, %v1441
    %v1443 = vmul.f32 %v1440, %v1442
    %v1444 = vadd.f32 %v1440, %v1443
    %vm1445 = vweird.f32 %v1439
    %vm1446 = vweird.f32 %v1440
    %vm1447 = vmor %vm1445, %vm1446
    %v1448 = vsel %vm1447, %v1440, %v1444
    %v1449 = vand.u32 2147483647, %v1439
    %vm1450 = vcmp.eq.f32.partialorder %v1449, 8.507059e+37
    %v1451 = vand.u32 %v1439, 2147483648
    %v1452 = vor.u32 1.1754944e-38, %v1451
    %v1453 = vsel %vm1450, %v1452, %v1448
    %v1454 = vmul.f32 %v1436, %v1453
    %1455 = vrot.lane.b32.xlu0 %v998, 88
    %v1456 = vpop.permute.xlu0 %1455
    %v1459 = vsel %vm88, %v1454, 0
    %1461 = vmatpush.msra.mxu0 0.0
    %1462 = vmatpush.msra.mxu0 0.0
    %1463 = vmatpush.msra.mxu0 0.0
    %1464 = vmatpush.msra.mxu0 0.0
    %1465 = vmatpush.msra.mxu0 0.0
    %1466 = vmatpush.msra.mxu0 0.0
    %1467 = vmatpush.msra.mxu0 0.0
    %1468 = vmatpush.msra.mxu0 0.0
    %1469 = vmatpush.msra.mxu0 0.0
    %1470 = vmatpush.msra.mxu0 0.0
    %1471 = vmatpush.msra.mxu0 0.0
    %1472 = vmatpush.msra.mxu0 0.0
    %1473 = vmatpush.msra.mxu0 0.0
    %1474 = vmatpush.msra.mxu0 0.0
    %1475 = vmatpush.msra.mxu0 0.0
    %1476 = vmatpush.msra.mxu0 %v1456
    %1477 = vmatmul.f32.gmra.mxu0 %v1459
    %v1478 = vpop.f32.mrf.mxu0
    %v1479 = vadd.f32 0.0, %v1478
    %1480 = vdwg.mxu0
    %1481 = vrot.lane.b32.xlu0 %v998, 80
    %v1482 = vpop.permute.xlu0 %1481
    %1483 = vrot.lane.b32.xlu0 %v998, 72
    %v1484 = vpop.permute.xlu0 %1483
    %v1485 = vsel %vm88, %v1482, 0
    %v1487 = vsel %vm88, %v1484, 0
    %1489 = vmatpush.xpose.msra.mxu0 0.0
    %1490 = vmatpush.xpose.msra.mxu0 0.0
    %1491 = vmatpush.xpose.msra.mxu0 0.0
    %1492 = vmatpush.xpose.msra.mxu0 0.0
    %1493 = vmatpush.xpose.msra.mxu0 0.0
    %1494 = vmatpush.xpose.msra.mxu0 0.0
    %1495 = vmatpush.xpose.msra.mxu0 0.0
    %1496 = vmatpush.xpose.msra.mxu0 0.0
    %1497 = vmatpush.xpose.msra.mxu0 0.0
    %1498 = vmatpush.xpose.msra.mxu0 0.0
    %1499 = vmatpush.xpose.msra.mxu0 0.0
    %1500 = vmatpush.xpose.msra.mxu0 0.0
    %1501 = vmatpush.xpose.msra.mxu0 0.0
    %1502 = vmatpush.xpose.msra.mxu0 0.0
    %1503 = vmatpush.xpose.msra.mxu0 0.0
    %1504 = vmatpush.xpose.msra.mxu0 %v1487
    %1505 = vmatmul.f32.gmra.mxu0 %v1485
    %v1506 = vpop.f32.mrf.mxu0
    %v1507 = vadd.f32 0.0, %v1506
    %1508 = vdwg.mxu0
    %v1509 = vsel %vm88, %v1507, -inf
    %1510 = vmax.xlane.f32.xlu0 %v1509
    %v1511 = vpop.xlane.xlu0 %1510
    %v1512 = vsub.f32 %v1507, %v1511
    %v1513 = vmul.f32 %v1512, 1.442695
    %v1514 = vpow.pop %v1513
    %v1515 = vsel %vm88, %v1514, 0.0
    %1516 = vadd.xlane.f32.xlu0 %v1515
    %v1517 = vpop.xlane.xlu0 %1516
    %v1518 = vrcp.pop %v1517
    %v1519 = vmul.f32 %v1517, %v1518
    %v1520 = vsub.f32 1.0, %v1519
    %v1521 = vmul.f32 %v1518, %v1520
    %v1522 = vadd.f32 %v1518, %v1521
    %vm1523 = vweird.f32 %v1517
    %vm1524 = vweird.f32 %v1518
    %vm1525 = vmor %vm1523, %vm1524
    %v1526 = vsel %vm1525, %v1518, %v1522
    %v1527 = vand.u32 2147483647, %v1517
    %vm1528 = vcmp.eq.f32.partialorder %v1527, 8.507059e+37
    %v1529 = vand.u32 %v1517, 2147483648
    %v1530 = vor.u32 1.1754944e-38, %v1529
    %v1531 = vsel %vm1528, %v1530, %v1526
    %v1532 = vmul.f32 %v1514, %v1531
    %1533 = vrot.lane.b32.xlu0 %v998, 64
    %v1534 = vpop.permute.xlu0 %1533
    %v1537 = vsel %vm88, %v1532, 0
    %1539 = vmatpush.msra.mxu0 0.0
    %1540 = vmatpush.msra.mxu0 0.0
    %1541 = vmatpush.msra.mxu0 0.0
    %1542 = vmatpush.msra.mxu0 0.0
    %1543 = vmatpush.msra.mxu0 0.0
    %1544 = vmatpush.msra.mxu0 0.0
    %1545 = vmatpush.msra.mxu0 0.0
    %1546 = vmatpush.msra.mxu0 0.0
    %1547 = vmatpush.msra.mxu0 0.0
    %1548 = vmatpush.msra.mxu0 0.0
    %1549 = vmatpush.msra.mxu0 0.0
    %1550 = vmatpush.msra.mxu0 0.0
    %1551 = vmatpush.msra.mxu0 0.0
    %1552 = vmatpush.msra.mxu0 0.0
    %1553 = vmatpush.msra.mxu0 0.0
    %1554 = vmatpush.msra.mxu0 %v1534
    %1555 = vmatmul.f32.gmra.mxu0 %v1537
    %v1556 = vpop.f32.mrf.mxu0
    %v1557 = vadd.f32 0.0, %v1556
    %1558 = vdwg.mxu0
    %1559 = vrot.lane.b32.xlu0 %v998, 56
    %v1560 = vpop.permute.xlu0 %1559
    %1561 = vrot.lane.b32.xlu0 %v998, 48
    %v1562 = vpop.permute.xlu0 %1561
    %v1563 = vsel %vm88, %v1560, 0
    %v1565 = vsel %vm88, %v1562, 0
    %1567 = vmatpush.xpose.msra.mxu0 0.0
    %1568 = vmatpush.xpose.msra.mxu0 0.0
    %1569 = vmatpush.xpose.msra.mxu0 0.0
    %1570 = vmatpush.xpose.msra.mxu0 0.0
    %1571 = vmatpush.xpose.msra.mxu0 0.0
    %1572 = vmatpush.xpose.msra.mxu0 0.0
    %1573 = vmatpush.xpose.msra.mxu0 0.0
    %1574 = vmatpush.xpose.msra.mxu0 0.0
    %1575 = vmatpush.xpose.msra.mxu0 0.0
    %1576 = vmatpush.xpose.msra.mxu0 0.0
    %1577 = vmatpush.xpose.msra.mxu0 0.0
    %1578 = vmatpush.xpose.msra.mxu0 0.0
    %1579 = vmatpush.xpose.msra.mxu0 0.0
    %1580 = vmatpush.xpose.msra.mxu0 0.0
    %1581 = vmatpush.xpose.msra.mxu0 0.0
    %1582 = vmatpush.xpose.msra.mxu0 %v1565
    %1583 = vmatmul.f32.gmra.mxu0 %v1563
    %v1584 = vpop.f32.mrf.mxu0
    %v1585 = vadd.f32 0.0, %v1584
    %1586 = vdwg.mxu0
    %v1587 = vsel %vm88, %v1585, -inf
    %1588 = vmax.xlane.f32.xlu0 %v1587
    %v1589 = vpop.xlane.xlu0 %1588
    %v1590 = vsub.f32 %v1585, %v1589
    %v1591 = vmul.f32 %v1590, 1.442695
    %v1592 = vpow.pop %v1591
    %v1593 = vsel %vm88, %v1592, 0.0
    %1594 = vadd.xlane.f32.xlu0 %v1593
    %v1595 = vpop.xlane.xlu0 %1594
    %v1596 = vrcp.pop %v1595
    %v1597 = vmul.f32 %v1595, %v1596
    %v1598 = vsub.f32 1.0, %v1597
    %v1599 = vmul.f32 %v1596, %v1598
    %v1600 = vadd.f32 %v1596, %v1599
    %vm1601 = vweird.f32 %v1595
    %vm1602 = vweird.f32 %v1596
    %vm1603 = vmor %vm1601, %vm1602
    %v1604 = vsel %vm1603, %v1596, %v1600
    %v1605 = vand.u32 2147483647, %v1595
    %vm1606 = vcmp.eq.f32.partialorder %v1605, 8.507059e+37
    %v1607 = vand.u32 %v1595, 2147483648
    %v1608 = vor.u32 1.1754944e-38, %v1607
    %v1609 = vsel %vm1606, %v1608, %v1604
    %v1610 = vmul.f32 %v1592, %v1609
    %1611 = vrot.lane.b32.xlu0 %v998, 40
    %v1612 = vpop.permute.xlu0 %1611
    %v1615 = vsel %vm88, %v1610, 0
    %1617 = vmatpush.msra.mxu0 0.0
    %1618 = vmatpush.msra.mxu0 0.0
    %1619 = vmatpush.msra.mxu0 0.0
    %1620 = vmatpush.msra.mxu0 0.0
    %1621 = vmatpush.msra.mxu0 0.0
    %1622 = vmatpush.msra.mxu0 0.0
    %1623 = vmatpush.msra.mxu0 0.0
    %1624 = vmatpush.msra.mxu0 0.0
    %1625 = vmatpush.msra.mxu0 0.0
    %1626 = vmatpush.msra.mxu0 0.0
    %1627 = vmatpush.msra.mxu0 0.0
    %1628 = vmatpush.msra.mxu0 0.0
    %1629 = vmatpush.msra.mxu0 0.0
    %1630 = vmatpush.msra.mxu0 0.0
    %1631 = vmatpush.msra.mxu0 0.0
    %1632 = vmatpush.msra.mxu0 %v1612
    %1633 = vmatmul.f32.gmra.mxu0 %v1615
    %v1634 = vpop.f32.mrf.mxu0
    %v1635 = vadd.f32 0.0, %v1634
    %1636 = vdwg.mxu0
    %1638 = vrot.lane.b32.xlu0 %v1479, 8
    %v1639 = vpop.permute.xlu0 %1638
    %1642 = vrot.lane.b32.xlu0 %v1557, 16
    %v1643 = vpop.permute.xlu0 %1642
    %1646 = vrot.lane.b32.xlu0 %v1635, 24
    %v1647 = vpop.permute.xlu0 %1646
    %v1649 = vsel %vm88, %v1401, %v1639
    %v1650 = vsel %vm410, %v1649, %v1643
    %v1651 = vsel %vm412, %v1650, %v1647
    %v1652 = vperm.slane %v969, 1
    %v1654 = vsel %vm55, %v1325, 0
    %v1657 = vsel %vm55, %v1651, 0
    %1659 = vmatpush.msra.mxu0 0.0
    %1660 = vmatpush.msra.mxu0 0.0
    %1661 = vmatpush.msra.mxu0 0.0
    %1662 = vmatpush.msra.mxu0 0.0
    %1663 = vmatpush.msra.mxu0 0.0
    %1664 = vmatpush.msra.mxu0 0.0
    %1665 = vmatpush.msra.mxu0 0.0
    %1666 = vmatpush.msra.mxu0 0.0
    %1667 = vmatpush.msra.mxu0 0.0
    %1668 = vmatpush.msra.mxu0 0.0
    %1669 = vmatpush.msra.mxu0 0.0
    %1670 = vmatpush.msra.mxu0 0.0
    %1671 = vmatpush.msra.mxu0 %v953
    %1672 = vmatpush.msra.mxu0 %v952
    %1673 = vmatpush.msra.mxu0 %v951
    %1674 = vmatpush.msra.mxu0 %v950
    %1675 = vmatmul.f32.gmra.mxu0 %v1654
    %v1676 = vpop.f32.mrf.mxu0
    %v1677 = vadd.f32 %v1652, %v1676
    %1678 = vmatmul.f32.gmra.mxu0 %v1657
    %v1679 = vpop.f32.mrf.mxu0
    %v1680 = vadd.f32 %v1652, %v1679
    %1681 = vdwg.mxu0
    %v1682 = vadd.f32 %v1677, %v942
    %v1683 = vadd.f32 %v1680, %v943
    %v1684 = vsel %vm55, %v1682, 0.0
    %1685 = vadd.xlane.f32.xlu0 %v1684
    %v1686 = vpop.xlane.xlu0 %1685
    %v1687 = vsel %vm55, %v1683, 0.0
    %1688 = vadd.xlane.f32.xlu0 %v1687
    %v1689 = vpop.xlane.xlu0 %1688
    %v1690 = vmul.f32 %v1686, %v784
    %v1691 = vmul.f32 %v1689, %v784
    %v1692 = vsub.f32 %v1682, %v1690
    %v1693 = vsub.f32 %v1683, %v1691
    %v1694 = vmul.f32 %v1692, %v1692
    %v1695 = vmul.f32 %v1693, %v1693
    %v1696 = vsel %vm55, %v1694, 0.0
    %1697 = vadd.xlane.f32.xlu0 %v1696
    %v1698 = vpop.xlane.xlu0 %1697
    %v1699 = vsel %vm55, %v1695, 0.0
    %1700 = vadd.xlane.f32.xlu0 %v1699
    %v1701 = vpop.xlane.xlu0 %1700
    %v1702 = vmul.f32 %v1698, %v784
    %v1703 = vmul.f32 %v1701, %v784
    %v1704 = vadd.f32 %v1702, 1e-12
    %v1705 = vadd.f32 %v1703, 1e-12
    %v1706 = vrsqrt.pop %v1704
    %v1707 = vmul.f32 %v1706, %v1704
    %v1708 = vmul.f32 %v1707, %v1706
    %v1709 = vmul.f32 0.5, %v1708
    %v1710 = vsub.f32 1.5, %v1709
    %v1711 = vmul.f32 %v1706, %v1710
    %vm1712 = vweird.f32 %v1704
    %vm1713 = vweird.f32 %v1706
    %vm1714 = vmor %vm1712, %vm1713
    %v1715 = vsel %vm1714, %v1706, %v1711
    %v1716 = vrsqrt.pop %v1705
    %v1717 = vmul.f32 %v1716, %v1705
    %v1718 = vmul.f32 %v1717, %v1716
    %v1719 = vmul.f32 0.5, %v1718
    %v1720 = vsub.f32 1.5, %v1719
    %v1721 = vmul.f32 %v1716, %v1720
    %vm1722 = vweird.f32 %v1705
    %vm1723 = vweird.f32 %v1716
    %vm1724 = vmor %vm1722, %vm1723
    %v1725 = vsel %vm1724, %v1716, %v1721
    %v1726 = vmul.f32 %v1692, %v1715
    %v1727 = vmul.f32 %v1693, %v1725
    %v1728 = vperm.slane %v969, 2
    %v1729 = vmul.f32 %v1726, %v1728
    %v1730 = vmul.f32 %v1727, %v1728
    %v1731 = vperm.slane %v969, 3
    %v1732 = vadd.f32 %v1729, %v1731
    %v1733 = vadd.f32 %v1730, %v1731
    %v1734 = vperm.slane %v969, 4
    %v1736 = vsel %vm55, %v1732, 0
    %v1739 = vsel %vm55, %v1733, 0
    %1741 = vmatpush.msra.mxu0 0.0
    %1742 = vmatpush.msra.mxu0 0.0
    %1743 = vmatpush.msra.mxu0 0.0
    %1744 = vmatpush.msra.mxu0 0.0
    %1745 = vmatpush.msra.mxu0 0.0
    %1746 = vmatpush.msra.mxu0 0.0
    %1747 = vmatpush.msra.mxu0 0.0
    %1748 = vmatpush.msra.mxu0 0.0
    %1749 = vmatpush.msra.mxu0 0.0
    %1750 = vmatpush.msra.mxu0 0.0
    %1751 = vmatpush.msra.mxu0 0.0
    %1752 = vmatpush.msra.mxu0 0.0
    %1753 = vmatpush.msra.mxu0 %v958
    %1754 = vmatpush.msra.mxu0 %v957
    %1755 = vmatpush.msra.mxu0 %v956
    %1756 = vmatpush.msra.mxu0 %v955
    %1757 = vmatmul.f32.gmra.mxu0 %v1736
    %v1758 = vpop.f32.mrf.mxu0
    %v1759 = vadd.f32 %v1734, %v1758
    %1760 = vmatmul.f32.gmra.mxu0 %v1739
    %v1761 = vpop.f32.mrf.mxu0
    %v1762 = vadd.f32 %v1734, %v1761
    %1763 = vdwg.mxu0
    %v1764 = vmax.f32 %v1759, 0.0
    %v1765 = vmax.f32 %v1762, 0.0
    %v1766 = vperm.slane %v969, 5
    %v1768 = vsel %vm862, %v1764, 0
    %v1771 = vsel %vm862, %v1765, 0
    %1773 = vmatpush.msra.mxu0 0.0
    %1774 = vmatpush.msra.mxu0 0.0
    %1775 = vmatpush.msra.mxu0 0.0
    %1776 = vmatpush.msra.mxu0 0.0
    %1777 = vmatpush.msra.mxu0 0.0
    %1778 = vmatpush.msra.mxu0 0.0
    %1779 = vmatpush.msra.mxu0 0.0
    %1780 = vmatpush.msra.mxu0 0.0
    %1781 = vmatpush.msra.mxu0 %v967
    %1782 = vmatpush.msra.mxu0 %v966
    %1783 = vmatpush.msra.mxu0 %v965
    %1784 = vmatpush.msra.mxu0 %v964
    %1785 = vmatpush.msra.mxu0 %v963
    %1786 = vmatpush.msra.mxu0 %v962
    %1787 = vmatpush.msra.mxu0 %v961
    %1788 = vmatpush.msra.mxu0 %v960
    %1789 = vmatmul.f32.gmra.mxu0 %v1768
    %v1790 = vpop.f32.mrf.mxu0
    %v1791 = vadd.f32 %v1766, %v1790
    %1792 = vmatmul.f32.gmra.mxu0 %v1771
    %v1793 = vpop.f32.mrf.mxu0
    %v1794 = vadd.f32 %v1766, %v1793
    %1795 = vdwg.mxu0
    %v1796 = vadd.f32 %v1791, %v1732
    %v1797 = vadd.f32 %v1794, %v1733
    %v1798 = vsel %vm55, %v1796, 0.0
    %1799 = vadd.xlane.f32.xlu0 %v1798
    %v1800 = vpop.xlane.xlu0 %1799
    %v1801 = vsel %vm55, %v1797, 0.0
    %1802 = vadd.xlane.f32.xlu0 %v1801
    %v1803 = vpop.xlane.xlu0 %1802
    %v1804 = vmul.f32 %v1800, %v784
    %v1805 = vmul.f32 %v1803, %v784
    %v1806 = vsub.f32 %v1796, %v1804
    %v1807 = vsub.f32 %v1797, %v1805
    %v1808 = vmul.f32 %v1806, %v1806
    %v1809 = vmul.f32 %v1807, %v1807
    %v1810 = vsel %vm55, %v1808, 0.0
    %1811 = vadd.xlane.f32.xlu0 %v1810
    %v1812 = vpop.xlane.xlu0 %1811
    %v1813 = vsel %vm55, %v1809, 0.0
    %1814 = vadd.xlane.f32.xlu0 %v1813
    %v1815 = vpop.xlane.xlu0 %1814
    %v1816 = vmul.f32 %v1812, %v784
    %v1817 = vmul.f32 %v1815, %v784
    %v1818 = vadd.f32 %v1816, 1e-12
    %v1819 = vadd.f32 %v1817, 1e-12
    %v1820 = vrsqrt.pop %v1818
    %v1821 = vmul.f32 %v1820, %v1818
    %v1822 = vmul.f32 %v1821, %v1820
    %v1823 = vmul.f32 0.5, %v1822
    %v1824 = vsub.f32 1.5, %v1823
    %v1825 = vmul.f32 %v1820, %v1824
    %vm1826 = vweird.f32 %v1818
    %vm1827 = vweird.f32 %v1820
    %vm1828 = vmor %vm1826, %vm1827
    %v1829 = vsel %vm1828, %v1820, %v1825
    %v1830 = vrsqrt.pop %v1819
    %v1831 = vmul.f32 %v1830, %v1819
    %v1832 = vmul.f32 %v1831, %v1830
    %v1833 = vmul.f32 0.5, %v1832
    %v1834 = vsub.f32 1.5, %v1833
    %v1835 = vmul.f32 %v1830, %v1834
    %vm1836 = vweird.f32 %v1819
    %vm1837 = vweird.f32 %v1830
    %vm1838 = vmor %vm1836, %vm1837
    %v1839 = vsel %vm1838, %v1830, %v1835
    %v1840 = vmul.f32 %v1806, %v1829
    %v1841 = vmul.f32 %v1807, %v1839
    %v1842 = vperm.slane %v969, 6
    %v1843 = vmul.f32 %v1840, %v1842
    %v1844 = vmul.f32 %v1841, %v1842
    %v1845 = vperm.slane %v969, 7
    %v1846 = vadd.f32 %v1843, %v1845
    %v1847 = vadd.f32 %v1844, %v1845
    %v1848 = vld [vmem:[%s6] sm:$0xff]
    %v1849 = vld [vmem:[%s6 + $0x8] sm:$0xff]
    %v1850 = vld [vmem:[%s6 + $0x10] sm:$0xff]
    %v1851 = vld [vmem:[%s6 + $0x18] sm:$0xff]
    %v1852 = vld [vmem:[%s7] sm:$0x1]
    %v1854 = vperm.slane %v1852, 0
    %v1857 = vsel %vm55, %v1846, 0
    %v1860 = vsel %vm55, %v1847, 0
    %1862 = vmatpush.msra.mxu0 0.0
    %1863 = vmatpush.msra.mxu0 0.0
    %1864 = vmatpush.msra.mxu0 0.0
    %1865 = vmatpush.msra.mxu0 0.0
    %1866 = vmatpush.msra.mxu0 0.0
    %1867 = vmatpush.msra.mxu0 0.0
    %1868 = vmatpush.msra.mxu0 0.0
    %1869 = vmatpush.msra.mxu0 0.0
    %1870 = vmatpush.msra.mxu0 0.0
    %1871 = vmatpush.msra.mxu0 0.0
    %1872 = vmatpush.msra.mxu0 0.0
    %1873 = vmatpush.msra.mxu0 0.0
    %1874 = vmatpush.msra.mxu0 %v1851
    %1875 = vmatpush.msra.mxu0 %v1850
    %1876 = vmatpush.msra.mxu0 %v1849
    %1877 = vmatpush.msra.mxu0 %v1848
    %1878 = vmatmul.f32.gmra.mxu0 %v1857
    %v1879 = vpop.f32.mrf.mxu0
    %v1880 = vadd.f32 %v1854, %v1879
    %1881 = vmatmul.f32.gmra.mxu0 %v1860
    %v1882 = vpop.f32.mrf.mxu0
    %v1883 = vadd.f32 %v1854, %v1882
    %1884 = vdwg.mxu0
    %v1886 = vrot.slane %v1880, 1
    %1887 = vrot.lane.b32.xlu0 %v1886, 16
    %v1888 = vpop.permute.xlu0 %1887
    %v1890 = vrot.slane %v1880, 2
    %1891 = vrot.lane.b32.xlu0 %v1890, 32
    %v1892 = vpop.permute.xlu0 %1891
    %v1894 = vrot.slane %v1880, 3
    %1895 = vrot.lane.b32.xlu0 %v1894, 48
    %v1896 = vpop.permute.xlu0 %1895
    %v1898 = vrot.slane %v1880, 4
    %1899 = vrot.lane.b32.xlu0 %v1898, 64
    %v1900 = vpop.permute.xlu0 %1899
    %v1902 = vrot.slane %v1880, 5
    %1903 = vrot.lane.b32.xlu0 %v1902, 80
    %v1904 = vpop.permute.xlu0 %1903
    %v1906 = vrot.slane %v1880, 6
    %1907 = vrot.lane.b32.xlu0 %v1906, 96
    %v1908 = vpop.permute.xlu0 %1907
    %v1910 = vrot.slane %v1880, 7
    %1911 = vrot.lane.b32.xlu0 %v1910, 112
    %v1912 = vpop.permute.xlu0 %1911
    %v1914 = vsel %vm410, %v1880, %v1888
    %v1915 = vsel %vm55, %v1914, %v1892
    %vm1916 = vcmask 392192
    %v1917 = vsel %vm1916, %v1915, %v1896
    %v1918 = vsel %vm862, %v1917, %v1900
    %vm1919 = vcmask 654336
    %v1920 = vsel %vm1919, %v1918, %v1904
    %vm1921 = vcmask 785408
    %v1922 = vsel %vm1921, %v1920, %v1908
    %vm1923 = vcmask 916480
    %v1924 = vsel %vm1923, %v1922, %v1912
    %v1926 = vrot.slane %v1883, 1
    %1927 = vrot.lane.b32.xlu0 %v1926, 16
    %v1928 = vpop.permute.xlu0 %1927
    %v1930 = vrot.slane %v1883, 2
    %1931 = vrot.lane.b32.xlu0 %v1930, 32
    %v1932 = vpop.permute.xlu0 %1931
    %v1934 = vrot.slane %v1883, 3
    %1935 = vrot.lane.b32.xlu0 %v1934, 48
    %v1936 = vpop.permute.xlu0 %1935
    %v1938 = vrot.slane %v1883, 4
    %1939 = vrot.lane.b32.xlu0 %v1938, 64
    %v1940 = vpop.permute.xlu0 %1939
    %v1942 = vrot.slane %v1883, 5
    %1943 = vrot.lane.b32.xlu0 %v1942, 80
    %v1944 = vpop.permute.xlu0 %1943
    %v1946 = vrot.slane %v1883, 6
    %1947 = vrot.lane.b32.xlu0 %v1946, 96
    %v1948 = vpop.permute.xlu0 %1947
    %v1950 = vrot.slane %v1883, 7
    %1951 = vrot.lane.b32.xlu0 %v1950, 112
    %v1952 = vpop.permute.xlu0 %1951
    %v1954 = vsel %vm410, %v1883, %v1928
    %v1955 = vsel %vm55, %v1954, %v1932
    %v1956 = vsel %vm1916, %v1955, %v1936
    %v1957 = vsel %vm862, %v1956, %v1940
    %v1958 = vsel %vm1919, %v1957, %v1944
    %v1959 = vsel %vm1921, %v1958, %v1948
    %v1960 = vsel %vm1923, %v1959, %v1952
    %v1962 = vrot.slane %v1960, 7
    %vm1964 = vcmask 1040384
    %v1965 = vsel %vm1964, %v1924, %v1962
    %1966 = vst [vmem:[#allocation2] sm:$0x3] %v1965
    // Predicated region
    $region34: #{tpu_custom_call.1} parent=1 // pred_check
      _
    $region35: #{tpu_custom_call.1} parent=1 // pred_check_branch
      %1968 = sbr.rel (0) target = $region37
    $region36: #{tpu_custom_call.1} parent=1 // pred_region
      %1970 = vsyncadd [#allocation3], 0
      %s1972 = sshll.u32 [#allocation2], 4
      %s1973 = int_to_ptr.vmem [resolvable:$true] %s1972
      %s1974 = sshll.u32 %s8, 4
      %s1975 = int_to_ptr.hbm [resolvable:$true] %s1974
      %1977 = dma.vmem_to_hbm [thread:$0]  %s1973, 32, %s1975, [#allocation3]
    $region37: #{tpu_custom_call.1} parent=1 // pred_fallthru
      _
    // Predicated region
    $region38: #{tpu_custom_call.1} parent=1 // pred_check
      _
    $region39: #{tpu_custom_call.1} parent=1 // pred_check_branch
      %1979 = sbr.rel (0) target = $region41
    $region40: #{tpu_custom_call.1} parent=1 // pred_region
      %1981 = dma.done [#allocation3], 32
    $region41: #{tpu_custom_call.1} parent=1 // pred_fallthru
      _
    %1982 = vsyncpa [#allocation3], 1

</llo_original>
